<compile_context>
chip_gen: v7x
topology: tpu7x:2x2x1
jax: 0.10.0
libtpu: 0.0.40
codegen_flags: <defaults>
</compile_context>

<pallas_src>
import functools
import math

import jax
import jax.numpy as jnp
import numpy as np
from jax.experimental import pallas as pl
from jax.experimental.pallas import tpu as pltpu


def _cdiv(a, b):
    return -(-a // b)


def _round_up(x, m):
    return _cdiv(x, m) * m


def _pick_tile_m(M, target=1024):
    """Large row tiles for DMA efficiency, but keep >=2 grid steps when M allows
    so the parallel row axis shards across v7x's two TensorCores."""
    if M <= target:
        steps = 2 if M > 256 else 1
    else:
        steps = _cdiv(M, target)
    return max(32, _round_up(_cdiv(M, steps), 32))


# ---------------------------------------------------------------------------
# Kernel: fused detection head
#   bbox_embed MLP (3 layers) + box reparam + class_embed + max-over-classes,
#   all merged into one (TM, C_pad) output slab:
#     lanes 0..C-1      : class logits
#     lanes C..C+3      : (cx, cy, w, h) reparameterised boxes
#     lane  C+4         : objectness = max over classes
#     lanes C+5..C_pad-1: -1e30 padding (sliced off in the wrapper)
# ---------------------------------------------------------------------------
def _head_kernel(hs_ref, ref_ref,
                 wf1_ref, bf1_ref, w2_ref, b2_ref, w3_ref, b3_ref,
                 out_ref, *, c_real, c_pad):
    x = hs_ref[...].astype(jnp.bfloat16)                               # (TM, H)

    # Fused first matmul: [class logits (padded to c_pad) | bbox-MLP layer-1].
    f1 = jnp.dot(x, wf1_ref[...], preferred_element_type=jnp.float32) + bf1_ref[...]
    logits = f1[:, :c_pad]                  # padded class lanes carry -1e30 bias
    # objectness = max over classes (padded lanes can't win: they hold -1e30).
    obj = jnp.max(logits, axis=-1, keepdims=True)                      # (TM, 1)

    # Remaining bbox_embed layers (ReLU between; bf16 matmul inputs, f32 accum).
    h1 = jnp.maximum(f1[:, c_pad:], 0.0).astype(jnp.bfloat16)
    h2 = jnp.maximum(
        jnp.dot(h1, w2_ref[...], preferred_element_type=jnp.float32) + b2_ref[...],
        0.0).astype(jnp.bfloat16)
    delta = jnp.dot(h2, w3_ref[...], preferred_element_type=jnp.float32) + b3_ref[...]
    # delta: (TM, c_pad) with the real (dx, dy, dw, dh) at lanes c_real..c_real+3.

    # Compact reference boxes -> per-lane scale/add, rebuilt in-kernel.
    ref = ref_ref[...]                                                  # (TM, 4) f32
    cx, cy = ref[:, 0:1], ref[:, 1:2]
    w, h = ref[:, 2:3], ref[:, 3:4]

    lane = jax.lax.broadcasted_iota(jnp.int32, delta.shape, 1)
    rel = lane - c_real                                                 # 0..3 = box lanes
    is_w = (rel == 0) | (rel == 2)
    is_h = (rel == 1) | (rel == 3)
    is_exp = (rel == 2) | (rel == 3)

    # Box reparameterisation (box_reparam=True branch), fully lane-parallel:
    #   dx*w + cx, dy*h + cy, exp(dw)*w, exp(dh)*h.
    # exp only sees the dw/dh lanes (others masked to 0) -> no spurious inf.
    d = jnp.where(is_exp, jnp.exp(jnp.where(is_exp, delta, 0.0)), delta)
    scale = jnp.where(is_w, w, jnp.where(is_h, h, 0.0))
    add = jnp.where(rel == 0, cx, jnp.where(rel == 1, cy, 0.0))
    coord = d * scale + add

    # Merge boxes + objectness into the logits padding lanes; single lane-dense store.
    payload = jnp.where(rel == 4, obj, coord)
    out_ref[...] = jnp.where((rel >= 0) & (rel <= 4), payload, logits)


def rfdetr_head(hs, ref_unsigmoid, params, tile_m=None):
    """Runs bbox_embed + box reparam + class_embed + objectness-max on TPU."""
    L, B, Q, H = hs.shape
    C = params["wc"].shape[1]
    C_pad = _round_up(C + 5, 128)          # payload lanes C..C+4 live inside the pad
    M = L * B * Q

    if tile_m is None:
        tile_m = _pick_tile_m(M)
    else:
        tile_m = max(32, _round_up(tile_m, 32))
    grid_m = _cdiv(M, tile_m)

    bf = jnp.bfloat16
    # --- weight layout plumbing (wrapper side, tiny & free) -----------------
    # Fused first matmul weight: [class_embed (padded to C_pad) | bbox layer-1].
    wc_pad = jnp.zeros((H, C_pad), jnp.float32).at[:, :C].set(params["wc"])
    bc_pad = jnp.full((1, C_pad), -1e30, jnp.float32).at[:, :C].set(params["bc"])
    wf1 = jnp.concatenate([wc_pad, params["w1"]], axis=1).astype(bf)    # (H, C_pad+H)
    bf1 = jnp.concatenate([bc_pad, params["b1"]], axis=1)               # f32
    w2 = params["w2"].astype(bf)
    b2 = params["b2"]
    # Last bbox layer: real (dx,dy,dw,dh) columns shifted to lanes C..C+3 so the
    # kernel merges boxes into the logits padding with a pure lane-select.
    w3_pad = jnp.zeros((H, C_pad), jnp.float32).at[:, C:C + 4].set(params["w3"]).astype(bf)
    b3_pad = jnp.zeros((1, C_pad), jnp.float32).at[:, C:C + 4].set(params["b3"])

    # --- activations: stream through HBM exactly once (no pad / no astype) --
    hs2 = hs.reshape(M, H)                  # cast to bf16 inside the kernel
    ref2 = ref_unsigmoid.reshape(M, 4)      # compact reparam operand

    row = lambda i: (i, 0)
    full = lambda i: (0, 0)
    kernel = functools.partial(_head_kernel, c_real=C, c_pad=C_pad)

    out = pl.pallas_call(
        kernel,
        out_shape=jax.ShapeDtypeStruct((M, C_pad), jnp.float32),
        grid=(grid_m,),
        in_specs=[pl.BlockSpec((tile_m, H), row),
                  pl.BlockSpec((tile_m, 4), row),
                  pl.BlockSpec((H, C_pad + H), full),
                  pl.BlockSpec((1, C_pad + H), full),
                  pl.BlockSpec((H, H), full),
                  pl.BlockSpec((1, H), full),
                  pl.BlockSpec((H, C_pad), full),
                  pl.BlockSpec((1, C_pad), full)],
        out_specs=pl.BlockSpec((tile_m, C_pad), row),
        compiler_params=pltpu.CompilerParams(
            dimension_semantics=("parallel",),
            vmem_limit_bytes=24 * 1024 * 1024),
    )(hs2, ref2, wf1, bf1, w2, b2, w3_pad, b3_pad)

    # Slice immediately: padded lanes/rows carry -1e30 and must never reach a consumer.
    outputs_class = out[:, :C].reshape(L, B, Q, C)
    outputs_coord = out[:, C:C + 4].reshape(L, B, Q, 4)
    objectness = out[:, C + 4].reshape(L, B, Q)
    return outputs_coord, outputs_class, objectness


# ---------------------------------------------------------------------------
# box_cxcywh_to_xyxy + per-image (w, h, w, h) scaling.
# Plain jnp: a (B, Q, 4) elementwise op as its own pallas_call is pure
# launch/grid-step overhead and XLA fuses it trivially.
# ---------------------------------------------------------------------------
def boxes_to_scaled_xyxy(pred_boxes, image_sizes):
    cx, cy, w, h = (pred_boxes[..., i] for i in range(4))
    xyxy = jnp.stack([cx - 0.5 * w, cy - 0.5 * h, cx + 0.5 * w, cy + 0.5 * h], axis=-1)
    # detectron2 image_sizes are (h, w); scale = [w, h, w, h]
    scale = jnp.stack([image_sizes[:, 1], image_sizes[:, 0],
                       image_sizes[:, 1], image_sizes[:, 0]], axis=-1).astype(jnp.float32)
    return xyxy * scale[:, None, :]


# ---------------------------------------------------------------------------
# Deterministic parameter init (shapes from the module's __init__).
# ---------------------------------------------------------------------------
def init_params(key, hidden_dim, num_classes):
    ks = jax.random.split(key, 4)
    s = 0.02
    prior_prob = 0.01
    bias_value = -math.log((1 - prior_prob) / prior_prob)
    return dict(
        # bbox_embed = MLP(hidden_dim, hidden_dim, 4, 3)
        w1=s * jax.random.normal(ks[0], (hidden_dim, hidden_dim), jnp.float32),
        b1=jnp.zeros((1, hidden_dim), jnp.float32),
        w2=s * jax.random.normal(ks[1], (hidden_dim, hidden_dim), jnp.float32),
        b2=jnp.zeros((1, hidden_dim), jnp.float32),
        # NOTE: PyTorch zero-inits the last bbox layer weight; a small random
        # weight is used so the kernel's last matmul is actually exercised.
        w3=s * jax.random.normal(ks[2], (hidden_dim, 4), jnp.float32),
        b3=jnp.zeros((1, 4), jnp.float32),
        # class_embed = Linear(hidden_dim, num_classes), bias = -log((1-p)/p)
        wc=s * jax.random.normal(ks[3], (hidden_dim, num_classes), jnp.float32),
        bc=jnp.full((1, num_classes), bias_value, jnp.float32),
    )


def fake_transformer(key, features, query_feat, dec_layers, num_queries, hidden_dim):
    # TODO(synk): the real RF-DETR deformable transformer (multi-scale deformable
    # attention, two-stage refinement from build_transformer) has no clean Pallas
    # equivalent here; a deterministic stand-in producing (hs, ref_unsigmoid) is used.
    B = features.shape[0]
    k1, k2, k3 = jax.random.split(key, 3)
    flat = features.reshape(B, -1)
    proj = 0.01 * jax.random.normal(k1, (flat.shape[1], hidden_dim), jnp.float32)
    ctx = flat @ proj                                                    # (B, H)
    hs = (query_feat[None, None] + ctx[None, :, None, :]
          + 0.1 * jax.random.normal(k2, (dec_layers, B, num_queries, hidden_dim), jnp.float32))
    ref = jax.nn.sigmoid(jax.random.normal(k3, (dec_layers, B, num_queries, 4), jnp.float32))
    return hs.astype(jnp.float32), ref.astype(jnp.float32)


# ---------------------------------------------------------------------------
# Pure-JAX reference replicating the PyTorch forward semantics, mirroring the
# kernel's mixed precision (bf16 matmul inputs, f32 accumulation & pointwise).
# ---------------------------------------------------------------------------
def reference_forward(hs, ref_unsigmoid, params, image_sizes):
    bf, f32 = jnp.bfloat16, jnp.float32
    L, B, Q, H = hs.shape
    x = hs.reshape(-1, H).astype(bf)
    h1 = jnp.maximum(
        jnp.dot(x, params["w1"].astype(bf), preferred_element_type=f32) + params["b1"],
        0.0).astype(bf)
    h2 = jnp.maximum(
        jnp.dot(h1, params["w2"].astype(bf), preferred_element_type=f32) + params["b2"],
        0.0).astype(bf)
    delta = (jnp.dot(h2, params["w3"].astype(bf), preferred_element_type=f32)
             + params["b3"]).reshape(L, B, Q, 4)
    outputs_class = (jnp.dot(x, params["wc"].astype(bf), preferred_element_type=f32)
                     + params["bc"]).reshape(L, B, Q, -1)
    cxcy = delta[..., :2] * ref_unsigmoid[..., 2:] + ref_unsigmoid[..., :2]
    wh = jnp.exp(delta[..., 2:]) * ref_unsigmoid[..., 2:]
    outputs_coord = jnp.concatenate([cxcy, wh], axis=-1)
    pred_boxes = outputs_coord[-1]
    pred_logits = outputs_class[-1]
    obj = pred_logits.max(axis=2)
    cx, cy, w, h = (pred_boxes[..., i] for i in range(4))
    xyxy = jnp.stack([cx - 0.5 * w, cy - 0.5 * h, cx + 0.5 * w, cy + 0.5 * h], axis=-1)
    scale = jnp.stack([image_sizes[:, 1], image_sizes[:, 0],
                       image_sizes[:, 1], image_sizes[:, 0]], axis=-1).astype(jnp.float32)
    return xyxy * scale[:, None, :], obj, outputs_coord, outputs_class


if __name__ == "__main__":
    key = jax.random.PRNGKey(0)
    B, C_feat, S = 2, 4, 16
    dec_layers, num_queries, hidden_dim, num_classes = 3, 100, 32, 8
    # M = 3*2*100 = 600 rows -> two row tiles of 320 (exercises a cdiv grid with
    # a masked partial last block and the >=2-step / 2-TensorCore path).

    k_feat, k_params, k_tr, k_q = jax.random.split(key, 4)
    features = jax.random.normal(k_feat, (B, C_feat, S, S), jnp.float32)  # NCHW, like PyTorch
    query_feat = 0.02 * jax.random.normal(k_q, (num_queries, hidden_dim), jnp.float32)
    params = init_params(k_params, hidden_dim, num_classes)
    image_sizes = jnp.array([[480.0, 640.0], [512.0, 384.0]], jnp.float32)  # (h, w) per image

    hs, ref_unsigmoid = fake_transformer(
        k_tr, features, query_feat, dec_layers, num_queries, hidden_dim)

    outputs_coord, outputs_class, objectness = rfdetr_head(hs, ref_unsigmoid, params)
    pred_boxes = outputs_coord[-1]                    # (B, Q, 4) cxcywh
    pred_objectness_logits = objectness[-1]           # (B, Q)
    proposal_boxes = boxes_to_scaled_xyxy(pred_boxes, image_sizes)  # (B, Q, 4) xyxy, image-scaled
    # TODO(synk): nonempty filtering, top-k selection, batched NMS and Instances
    # construction from _create_proposals_from_boxes are data-dependent host-side
    # ops with no Pallas equivalent; the training loss path is likewise omitted.

    jax.block_until_ready((proposal_boxes, pred_objectness_logits))

    ref_boxes, ref_obj, ref_coord, ref_cls = reference_forward(
        hs, ref_unsigmoid, params, image_sizes)
    np.testing.assert_allclose(np.asarray(outputs_coord), np.asarray(ref_coord),
                               rtol=1e-4, atol=1e-4)
    np.testing.assert_allclose(np.asarray(outputs_class), np.asarray(ref_cls),
                               rtol=1e-4, atol=1e-4)
    np.testing.assert_allclose(np.asarray(pred_objectness_logits), np.asarray(ref_obj),
                               rtol=1e-4, atol=1e-4)
    np.testing.assert_allclose(np.asarray(proposal_boxes), np.asarray(ref_boxes),
                               rtol=1e-4, atol=1e-2)

    print("KERNEL_OK")
</pallas_src>

<mosaic_0001>
module attributes {stable_mosaic.version = 11 : i64} {
  func.func @_head_kernel(%arg0: i32, %arg1: memref<320x32xf32, #tpu.memory_space<vmem>>, %arg2: memref<320x4xf32, #tpu.memory_space<vmem>>, %arg3: memref<32x160xbf16, #tpu.memory_space<vmem>>, %arg4: memref<1x160xf32, #tpu.memory_space<vmem>>, %arg5: memref<32x32xbf16, #tpu.memory_space<vmem>>, %arg6: memref<1x32xf32, #tpu.memory_space<vmem>>, %arg7: memref<32x128xbf16, #tpu.memory_space<vmem>>, %arg8: memref<1x128xf32, #tpu.memory_space<vmem>>, %arg9: memref<320x128xf32, #tpu.memory_space<vmem>>) attributes {dimension_semantics = [#tpu.dimension_semantics<parallel>], iteration_bounds = array<i64: 2>, scalar_prefetch = 0 : i64, scratch_operands = 0 : i64, tpu.core_type = #tpu.core_type<tc>, window_params = [{transform_indices = @transform_0, window_bounds = array<i64: 320, 32>}, {transform_indices = @transform_1, window_bounds = array<i64: 320, 4>}, {pipeline_mode = #tpu.pipeline_mode<synchronous>, transform_indices = @transform_2, window_bounds = array<i64: 32, 160>}, {pipeline_mode = #tpu.pipeline_mode<synchronous>, transform_indices = @transform_3, window_bounds = array<i64: 1, 160>}, {pipeline_mode = #tpu.pipeline_mode<synchronous>, transform_indices = @transform_4, window_bounds = array<i64: 32, 32>}, {pipeline_mode = #tpu.pipeline_mode<synchronous>, transform_indices = @transform_5, window_bounds = array<i64: 1, 32>}, {pipeline_mode = #tpu.pipeline_mode<synchronous>, transform_indices = @transform_6, window_bounds = array<i64: 32, 128>}, {pipeline_mode = #tpu.pipeline_mode<synchronous>, transform_indices = @transform_7, window_bounds = array<i64: 1, 128>}, {transform_indices = @transform_8, window_bounds = array<i64: 320, 128>}]} {
    %c0 = arith.constant 0 : index
    %c0_0 = arith.constant 0 : index
    %0 = vector.load %arg1[%c0, %c0_0] : memref<320x32xf32, #tpu.memory_space<vmem>>, vector<320x32xf32>
    %1 = arith.truncf %0 : vector<320x32xf32> to vector<320x32xbf16>
    %c0_1 = arith.constant 0 : index
    %c0_2 = arith.constant 0 : index
    %2 = vector.load %arg3[%c0_1, %c0_2] : memref<32x160xbf16, #tpu.memory_space<vmem>>, vector<32x160xbf16>
    %cst = arith.constant dense<0.000000e+00> : vector<320x160xf32>
    %3 = tpu.matmul %1, %2, %cst {dimension_numbers = #tpu.dot_dimension_numbers<[1], [0], [0], [1], [0, 0, 1, 1], [], []>} : vector<320x32xbf16>, vector<32x160xbf16>, vector<320x160xf32> -> vector<320x160xf32>
    %c0_3 = arith.constant 0 : index
    %c0_4 = arith.constant 0 : index
    %4 = vector.load %arg4[%c0_3, %c0_4] : memref<1x160xf32, #tpu.memory_space<vmem>>, vector<1x160xf32>
    %5 = vector.broadcast %4 : vector<1x160xf32> to vector<320x160xf32>
    %6 = arith.addf %3, %5 : vector<320x160xf32>
    %7 = vector.extract_strided_slice %6 {offsets = [0, 0], sizes = [320, 128], strides = [1, 1]} : vector<320x160xf32> to vector<320x128xf32>
    %cst_5 = arith.constant dense<0xFF800000> : vector<320xf32>
    %8 = vector.multi_reduction <maximumf>, %7, %cst_5 [1] : vector<320x128xf32> to vector<320xf32>
    %9 = vector.shape_cast %8 : vector<320xf32> to vector<320x1xf32>
    %10 = vector.extract_strided_slice %6 {offsets = [0, 128], sizes = [320, 32], strides = [1, 1]} : vector<320x160xf32> to vector<320x32xf32>
    %cst_6 = arith.constant 0.000000e+00 : f32
    %11 = vector.broadcast %cst_6 : f32 to vector<320x32xf32>
    %12 = arith.maximumf %10, %11 : vector<320x32xf32>
    %13 = arith.truncf %12 : vector<320x32xf32> to vector<320x32xbf16>
    %c0_7 = arith.constant 0 : index
    %c0_8 = arith.constant 0 : index
    %14 = vector.load %arg5[%c0_7, %c0_8] : memref<32x32xbf16, #tpu.memory_space<vmem>>, vector<32x32xbf16>
    %cst_9 = arith.constant dense<0.000000e+00> : vector<320x32xf32>
    %15 = tpu.matmul %13, %14, %cst_9 {dimension_numbers = #tpu.dot_dimension_numbers<[1], [0], [0], [1], [0, 0, 1, 1], [], []>} : vector<320x32xbf16>, vector<32x32xbf16>, vector<320x32xf32> -> vector<320x32xf32>
    %c0_10 = arith.constant 0 : index
    %c0_11 = arith.constant 0 : index
    %16 = vector.load %arg6[%c0_10, %c0_11] : memref<1x32xf32, #tpu.memory_space<vmem>>, vector<1x32xf32>
    %17 = vector.broadcast %16 : vector<1x32xf32> to vector<320x32xf32>
    %18 = arith.addf %15, %17 : vector<320x32xf32>
    %cst_12 = arith.constant 0.000000e+00 : f32
    %19 = vector.broadcast %cst_12 : f32 to vector<320x32xf32>
    %20 = arith.maximumf %18, %19 : vector<320x32xf32>
    %21 = arith.truncf %20 : vector<320x32xf32> to vector<320x32xbf16>
    %c0_13 = arith.constant 0 : index
    %c0_14 = arith.constant 0 : index
    %22 = vector.load %arg7[%c0_13, %c0_14] : memref<32x128xbf16, #tpu.memory_space<vmem>>, vector<32x128xbf16>
    %cst_15 = arith.constant dense<0.000000e+00> : vector<320x128xf32>
    %23 = tpu.matmul %21, %22, %cst_15 {dimension_numbers = #tpu.dot_dimension_numbers<[1], [0], [0], [1], [0, 0, 1, 1], [], []>} : vector<320x32xbf16>, vector<32x128xbf16>, vector<320x128xf32> -> vector<320x128xf32>
    %c0_16 = arith.constant 0 : index
    %c0_17 = arith.constant 0 : index
    %24 = vector.load %arg8[%c0_16, %c0_17] : memref<1x128xf32, #tpu.memory_space<vmem>>, vector<1x128xf32>
    %25 = vector.broadcast %24 : vector<1x128xf32> to vector<320x128xf32>
    %26 = arith.addf %23, %25 : vector<320x128xf32>
    %c0_18 = arith.constant 0 : index
    %c0_19 = arith.constant 0 : index
    %27 = vector.load %arg2[%c0_18, %c0_19] : memref<320x4xf32, #tpu.memory_space<vmem>>, vector<320x4xf32>
    %28 = vector.extract_strided_slice %27 {offsets = [0, 0], sizes = [320, 1], strides = [1, 1]} : vector<320x4xf32> to vector<320x1xf32>
    %29 = vector.extract_strided_slice %27 {offsets = [0, 1], sizes = [320, 1], strides = [1, 1]} : vector<320x4xf32> to vector<320x1xf32>
    %30 = vector.extract_strided_slice %27 {offsets = [0, 2], sizes = [320, 1], strides = [1, 1]} : vector<320x4xf32> to vector<320x1xf32>
    %31 = vector.extract_strided_slice %27 {offsets = [0, 3], sizes = [320, 1], strides = [1, 1]} : vector<320x4xf32> to vector<320x1xf32>
    %32 = tpu.iota {dimensions = array<i32: 1>} : vector<320x128xi32>
    %c8_i32 = arith.constant 8 : i32
    %33 = vector.broadcast %c8_i32 : i32 to vector<320x128xi32>
    %34 = arith.subi %32, %33 : vector<320x128xi32>
    %c0_i32 = arith.constant 0 : i32
    %35 = vector.broadcast %c0_i32 : i32 to vector<320x128xi32>
    %36 = arith.cmpi eq, %34, %35 : vector<320x128xi32>
    %c2_i32 = arith.constant 2 : i32
    %37 = vector.broadcast %c2_i32 : i32 to vector<320x128xi32>
    %38 = arith.cmpi eq, %34, %37 : vector<320x128xi32>
    %39 = arith.ori %36, %38 : vector<320x128xi1>
    %c1_i32 = arith.constant 1 : i32
    %40 = vector.broadcast %c1_i32 : i32 to vector<320x128xi32>
    %41 = arith.cmpi eq, %34, %40 : vector<320x128xi32>
    %c3_i32 = arith.constant 3 : i32
    %42 = vector.broadcast %c3_i32 : i32 to vector<320x128xi32>
    %43 = arith.cmpi eq, %34, %42 : vector<320x128xi32>
    %44 = arith.ori %41, %43 : vector<320x128xi1>
    %c2_i32_20 = arith.constant 2 : i32
    %45 = vector.broadcast %c2_i32_20 : i32 to vector<320x128xi32>
    %46 = arith.cmpi eq, %34, %45 : vector<320x128xi32>
    %c3_i32_21 = arith.constant 3 : i32
    %47 = vector.broadcast %c3_i32_21 : i32 to vector<320x128xi32>
    %48 = arith.cmpi eq, %34, %47 : vector<320x128xi32>
    %49 = arith.ori %46, %48 : vector<320x128xi1>
    %cst_22 = arith.constant 0.000000e+00 : f32
    %50 = vector.broadcast %cst_22 : f32 to vector<320x128xf32>
    %51 = arith.select %49, %26, %50 : vector<320x128xi1>, vector<320x128xf32>
    %52 = math.exp %51 : vector<320x128xf32>
    %53 = arith.select %49, %52, %26 : vector<320x128xi1>, vector<320x128xf32>
    %cst_23 = arith.constant 0.000000e+00 : f32
    %54 = vector.shape_cast %31 : vector<320x1xf32> to vector<320x1xf32>
    %55 = vector.broadcast %54 : vector<320x1xf32> to vector<320x128xf32>
    %56 = vector.broadcast %cst_23 : f32 to vector<320x128xf32>
    %57 = arith.select %44, %55, %56 : vector<320x128xi1>, vector<320x128xf32>
    %58 = vector.shape_cast %30 : vector<320x1xf32> to vector<320x1xf32>
    %59 = vector.broadcast %58 : vector<320x1xf32> to vector<320x128xf32>
    %60 = arith.select %39, %59, %57 : vector<320x128xi1>, vector<320x128xf32>
    %c0_i32_24 = arith.constant 0 : i32
    %61 = vector.broadcast %c0_i32_24 : i32 to vector<320x128xi32>
    %62 = arith.cmpi eq, %34, %61 : vector<320x128xi32>
    %c1_i32_25 = arith.constant 1 : i32
    %63 = vector.broadcast %c1_i32_25 : i32 to vector<320x128xi32>
    %64 = arith.cmpi eq, %34, %63 : vector<320x128xi32>
    %cst_26 = arith.constant 0.000000e+00 : f32
    %65 = vector.shape_cast %29 : vector<320x1xf32> to vector<320x1xf32>
    %66 = vector.broadcast %65 : vector<320x1xf32> to vector<320x128xf32>
    %67 = vector.broadcast %cst_26 : f32 to vector<320x128xf32>
    %68 = arith.select %64, %66, %67 : vector<320x128xi1>, vector<320x128xf32>
    %69 = vector.shape_cast %28 : vector<320x1xf32> to vector<320x1xf32>
    %70 = vector.broadcast %69 : vector<320x1xf32> to vector<320x128xf32>
    %71 = arith.select %62, %70, %68 : vector<320x128xi1>, vector<320x128xf32>
    %72 = arith.mulf %53, %60 : vector<320x128xf32>
    %73 = arith.addf %72, %71 : vector<320x128xf32>
    %c4_i32 = arith.constant 4 : i32
    %74 = vector.broadcast %c4_i32 : i32 to vector<320x128xi32>
    %75 = arith.cmpi eq, %34, %74 : vector<320x128xi32>
    %76 = vector.shape_cast %9 : vector<320x1xf32> to vector<320x1xf32>
    %77 = vector.broadcast %76 : vector<320x1xf32> to vector<320x128xf32>
    %78 = arith.select %75, %77, %73 : vector<320x128xi1>, vector<320x128xf32>
    %c0_i32_27 = arith.constant 0 : i32
    %79 = vector.broadcast %c0_i32_27 : i32 to vector<320x128xi32>
    %80 = arith.cmpi sge, %34, %79 : vector<320x128xi32>
    %c4_i32_28 = arith.constant 4 : i32
    %81 = vector.broadcast %c4_i32_28 : i32 to vector<320x128xi32>
    %82 = arith.cmpi sle, %34, %81 : vector<320x128xi32>
    %83 = arith.andi %80, %82 : vector<320x128xi1>
    %84 = arith.select %83, %78, %7 : vector<320x128xi1>, vector<320x128xf32>
    %c0_29 = arith.constant 0 : index
    %c0_30 = arith.constant 0 : index
    %85 = vector.load %arg9[%c0_29, %c0_30] : memref<320x128xf32, #tpu.memory_space<vmem>>, vector<320x128xf32>
    tpu.vector_store %arg9[%c0_29, %c0_30], %84 {strides = array<i32>} : memref<320x128xf32, #tpu.memory_space<vmem>>, vector<320x128xf32>,
    return
  }
  func.func @transform_0(%arg0: i32) -> (i32, i32) {
    %c0_i32 = arith.constant 0 : i32
    %c0_i32_0 = arith.constant 0 : i32
    return %arg0, %c0_i32 : i32, i32
  }
  func.func @transform_1(%arg0: i32) -> (i32, i32) {
    %c0_i32 = arith.constant 0 : i32
    %c0_i32_0 = arith.constant 0 : i32
    return %arg0, %c0_i32 : i32, i32
  }
  func.func @transform_2(%arg0: i32) -> (i32, i32) {
    %c0_i32 = arith.constant 0 : i32
    %c0_i32_0 = arith.constant 0 : i32
    %c0_i32_1 = arith.constant 0 : i32
    return %c0_i32, %c0_i32_0 : i32, i32
  }
  func.func @transform_3(%arg0: i32) -> (i32, i32) {
    %c0_i32 = arith.constant 0 : i32
    %c0_i32_0 = arith.constant 0 : i32
    %c0_i32_1 = arith.constant 0 : i32
    return %c0_i32, %c0_i32_0 : i32, i32
  }
  func.func @transform_4(%arg0: i32) -> (i32, i32) {
    %c0_i32 = arith.constant 0 : i32
    %c0_i32_0 = arith.constant 0 : i32
    %c0_i32_1 = arith.constant 0 : i32
    return %c0_i32, %c0_i32_0 : i32, i32
  }
  func.func @transform_5(%arg0: i32) -> (i32, i32) {
    %c0_i32 = arith.constant 0 : i32
    %c0_i32_0 = arith.constant 0 : i32
    %c0_i32_1 = arith.constant 0 : i32
    return %c0_i32, %c0_i32_0 : i32, i32
  }
  func.func @transform_6(%arg0: i32) -> (i32, i32) {
    %c0_i32 = arith.constant 0 : i32
    %c0_i32_0 = arith.constant 0 : i32
    %c0_i32_1 = arith.constant 0 : i32
    return %c0_i32, %c0_i32_0 : i32, i32
  }
  func.func @transform_7(%arg0: i32) -> (i32, i32) {
    %c0_i32 = arith.constant 0 : i32
    %c0_i32_0 = arith.constant 0 : i32
    %c0_i32_1 = arith.constant 0 : i32
    return %c0_i32, %c0_i32_0 : i32, i32
  }
  func.func @transform_8(%arg0: i32) -> (i32, i32) {
    %c0_i32 = arith.constant 0 : i32
    %c0_i32_0 = arith.constant 0 : i32
    return %arg0, %c0_i32 : i32, i32
  }
}

</mosaic_0001>

<llo_original>
// kernel: tpu_custom_call.1
$region0: #{tpu_custom_call.1}
  #allocation0 [shape = 'u32[]', space=smem, size = 0x4, offset = 0x4, fixed_abs, tag = 'smem constant byte address 0x4 - core index']
  #allocation1 [shape = 'u32[144,128]{1,0:T(1,128)}', space=vmem, size = 0x12000, scoped, tag = 'internal scratch']
  %s0 = inlined_call_operand.vmem [shape: f32[600,32], index: 0, kind: input, shape index: {}]
  %s1 = inlined_call_operand.vmem [shape: f32[600,4], index: 1, kind: input, shape index: {}]
  %s2 = inlined_call_operand.vmem [shape: bf16[32,160], index: 2, kind: input, shape index: {}]
  %s3 = inlined_call_operand.vmem [shape: f32[1,160], index: 3, kind: input, shape index: {}]
  %s4 = inlined_call_operand.vmem [shape: bf16[32,32], index: 4, kind: input, shape index: {}]
  %s5 = inlined_call_operand.vmem [shape: f32[1,32], index: 5, kind: input, shape index: {}]
  %s6 = inlined_call_operand.vmem [shape: bf16[32,128], index: 6, kind: input, shape index: {}]
  %s7 = inlined_call_operand.vmem [shape: f32[1,128], index: 7, kind: input, shape index: {}]
  %s8 = inlined_call_operand.hbm [shape: f32[600,128], index: 8, kind: output, shape index: {}]
  %s9 = sld [smem:[#allocation0]]
  $region65: #{tpu_custom_call.1} parent=0
    _
  %s11 = ssub.s32 1, %s9
  %s12 = scalar_select 0, %s11, %s9
  $region1: #{tpu_custom_call.1} parent=0
    #allocation2 [shape = 'u8[327680]{0}', space=vmem, size = 0x50000, scoped, tag = 'output window, operand 0']
    #allocation3 [shape = 's32[2]{0}', space=sflag, size = 0x8, scoped, tag = 'scoped memory for tpu_custom_call.1']
    %13 = vsyncpa [#allocation3], 0
    %s14 = scalar_lea.sflag [#allocation3], 1
    %15 = vsyncpa %s14, 0
    loop: start=0, step=1, limit=4
    $region2: #{tpu_custom_call.1} parent=1 // loop_pre_header
      _
    $region3: #{tpu_custom_call.1} parent=1 // loop_header
      %s17 = sphi 0, %s21
      %p18 = scmp.ge.s32.totalorder %s17, 4
      %s27 = sphi 0, %s29
      %s30 = sphi 0, %s27
      %s31 = sphi 0, %s30
      %s47 = sphi 0, %s31
      %s53 = sphi 0, %s55
      %s56 = sphi 0, %s53
      %s57 = sphi 0, %s56
      %s73 = sphi 0, %s57
      %s77 = sphi 0, %s77
      %s79 = sphi 0, %s77
      %s80 = sphi 0, %s79
      %s94 = sphi 0, %s80
      %s98 = sphi 0, %s98
      %s100 = sphi 0, %s98
      %s101 = sphi 0, %s100
      %s115 = sphi 0, %s101
      %s119 = sphi 0, %s119
      %s121 = sphi 0, %s119
      %s122 = sphi 0, %s121
      %s136 = sphi 0, %s122
      %s140 = sphi 0, %s140
      %s142 = sphi 0, %s140
      %s143 = sphi 0, %s142
      %s157 = sphi 0, %s143
      %s161 = sphi 0, %s161
      %s163 = sphi 0, %s161
      %s164 = sphi 0, %s163
      %s178 = sphi 0, %s164
      %s182 = sphi 0, %s182
      %s184 = sphi 0, %s182
      %s185 = sphi 0, %s184
      %s199 = sphi 0, %s185
      %s205 = sphi 0, %s207
      %s208 = sphi 0, %s205
      %s209 = sphi 0, %s208
      %s225 = sphi 0, %s209
    $region4: #{tpu_custom_call.1} parent=1 // loop_header_branch
      %20 = sbr.rel (%p18) target = $region8
    $region5: #{tpu_custom_call.1} parent=1 // loop_body
      %s22 = ssub.s32 %s17, 1
      %s23 = ssub.s32 %s17, 2
      %s24 = sadd.s32 %s17, 1
      %s25 = ssub.s32 %s17, %s24
      %p26 = scmp.eq.s32.totalorder %s25, 0
      %s28 = sadd.s32 %s27, 1
      %s29 = scalar_select %p26, %s27, %s28
      %p32 = pneg %p26
      %p33 = scmp.eq.s32.totalorder %s17, 1
      %p34 = por %p32, %p33
      %p35 = scmp.ne.s32.totalorder %s27, %s30
      %p36 = scmp.eq.s32.totalorder %s17, 0
      %p37 = por %p35, %p36
      %p38 = scmp.ne.s32.totalorder %s27, %s30
      %p39 = scmp.eq.s32.totalorder %s22, 1
      %p40 = por %p38, %p39
      %p41 = scmp.ne.s32.totalorder %s30, %s31
      %p42 = scmp.eq.s32.totalorder %s22, 0
      %p43 = por %p41, %p42
      %p44 = scmp.ne.s32.totalorder %s30, %s31
      %p45 = scmp.eq.s32.totalorder %s23, 1
      %p46 = por %p44, %p45
      %p48 = scmp.ne.s32.totalorder %s31, %s47
      %p49 = scmp.eq.s32.totalorder %s23, 0
      %p50 = por %p48, %p49
      %s51 = ssub.s32 %s17, %s24
      %p52 = scmp.eq.s32.totalorder %s51, 0
      %s54 = sadd.s32 %s53, 1
      %s55 = scalar_select %p52, %s53, %s54
      %p58 = pneg %p52
      %p59 = scmp.eq.s32.totalorder %s17, 1
      %p60 = por %p58, %p59
      %p61 = scmp.ne.s32.totalorder %s53, %s56
      %p62 = scmp.eq.s32.totalorder %s17, 0
      %p63 = por %p61, %p62
      %p64 = scmp.ne.s32.totalorder %s53, %s56
      %p65 = scmp.eq.s32.totalorder %s22, 1
      %p66 = por %p64, %p65
      %p67 = scmp.ne.s32.totalorder %s56, %s57
      %p68 = scmp.eq.s32.totalorder %s22, 0
      %p69 = por %p67, %p68
      %p70 = scmp.ne.s32.totalorder %s56, %s57
      %p71 = scmp.eq.s32.totalorder %s23, 1
      %p72 = por %p70, %p71
      %p74 = scmp.ne.s32.totalorder %s57, %s73
      %p75 = scmp.eq.s32.totalorder %s23, 0
      %p76 = por %p74, %p75
      %s78 = sadd.s32 %s77, 1
      %p81 = scmp.eq.s32.totalorder %s17, 1
      %p82 = scmp.ne.s32.totalorder %s77, %s79
      %p83 = scmp.eq.s32.totalorder %s17, 0
      %p84 = por %p82, %p83
      %p85 = scmp.ne.s32.totalorder %s77, %s79
      %p86 = scmp.eq.s32.totalorder %s22, 1
      %p87 = por %p85, %p86
      %p88 = scmp.ne.s32.totalorder %s79, %s80
      %p89 = scmp.eq.s32.totalorder %s22, 0
      %p90 = por %p88, %p89
      %p91 = scmp.ne.s32.totalorder %s79, %s80
      %p92 = scmp.eq.s32.totalorder %s23, 1
      %p93 = por %p91, %p92
      %p95 = scmp.ne.s32.totalorder %s80, %s94
      %p96 = scmp.eq.s32.totalorder %s23, 0
      %p97 = por %p95, %p96
      %s99 = sadd.s32 %s98, 1
      %p102 = scmp.eq.s32.totalorder %s17, 1
      %p103 = scmp.ne.s32.totalorder %s98, %s100
      %p104 = scmp.eq.s32.totalorder %s17, 0
      %p105 = por %p103, %p104
      %p106 = scmp.ne.s32.totalorder %s98, %s100
      %p107 = scmp.eq.s32.totalorder %s22, 1
      %p108 = por %p106, %p107
      %p109 = scmp.ne.s32.totalorder %s100, %s101
      %p110 = scmp.eq.s32.totalorder %s22, 0
      %p111 = por %p109, %p110
      %p112 = scmp.ne.s32.totalorder %s100, %s101
      %p113 = scmp.eq.s32.totalorder %s23, 1
      %p114 = por %p112, %p113
      %p116 = scmp.ne.s32.totalorder %s101, %s115
      %p117 = scmp.eq.s32.totalorder %s23, 0
      %p118 = por %p116, %p117
      %s120 = sadd.s32 %s119, 1
      %p123 = scmp.eq.s32.totalorder %s17, 1
      %p124 = scmp.ne.s32.totalorder %s119, %s121
      %p125 = scmp.eq.s32.totalorder %s17, 0
      %p126 = por %p124, %p125
      %p127 = scmp.ne.s32.totalorder %s119, %s121
      %p128 = scmp.eq.s32.totalorder %s22, 1
      %p129 = por %p127, %p128
      %p130 = scmp.ne.s32.totalorder %s121, %s122
      %p131 = scmp.eq.s32.totalorder %s22, 0
      %p132 = por %p130, %p131
      %p133 = scmp.ne.s32.totalorder %s121, %s122
      %p134 = scmp.eq.s32.totalorder %s23, 1
      %p135 = por %p133, %p134
      %p137 = scmp.ne.s32.totalorder %s122, %s136
      %p138 = scmp.eq.s32.totalorder %s23, 0
      %p139 = por %p137, %p138
      %s141 = sadd.s32 %s140, 1
      %p144 = scmp.eq.s32.totalorder %s17, 1
      %p145 = scmp.ne.s32.totalorder %s140, %s142
      %p146 = scmp.eq.s32.totalorder %s17, 0
      %p147 = por %p145, %p146
      %p148 = scmp.ne.s32.totalorder %s140, %s142
      %p149 = scmp.eq.s32.totalorder %s22, 1
      %p150 = por %p148, %p149
      %p151 = scmp.ne.s32.totalorder %s142, %s143
      %p152 = scmp.eq.s32.totalorder %s22, 0
      %p153 = por %p151, %p152
      %p154 = scmp.ne.s32.totalorder %s142, %s143
      %p155 = scmp.eq.s32.totalorder %s23, 1
      %p156 = por %p154, %p155
      %p158 = scmp.ne.s32.totalorder %s143, %s157
      %p159 = scmp.eq.s32.totalorder %s23, 0
      %p160 = por %p158, %p159
      %s162 = sadd.s32 %s161, 1
      %p165 = scmp.eq.s32.totalorder %s17, 1
      %p166 = scmp.ne.s32.totalorder %s161, %s163
      %p167 = scmp.eq.s32.totalorder %s17, 0
      %p168 = por %p166, %p167
      %p169 = scmp.ne.s32.totalorder %s161, %s163
      %p170 = scmp.eq.s32.totalorder %s22, 1
      %p171 = por %p169, %p170
      %p172 = scmp.ne.s32.totalorder %s163, %s164
      %p173 = scmp.eq.s32.totalorder %s22, 0
      %p174 = por %p172, %p173
      %p175 = scmp.ne.s32.totalorder %s163, %s164
      %p176 = scmp.eq.s32.totalorder %s23, 1
      %p177 = por %p175, %p176
      %p179 = scmp.ne.s32.totalorder %s164, %s178
      %p180 = scmp.eq.s32.totalorder %s23, 0
      %p181 = por %p179, %p180
      %s183 = sadd.s32 %s182, 1
      %p186 = scmp.eq.s32.totalorder %s17, 1
      %p187 = scmp.ne.s32.totalorder %s182, %s184
      %p188 = scmp.eq.s32.totalorder %s17, 0
      %p189 = por %p187, %p188
      %p190 = scmp.ne.s32.totalorder %s182, %s184
      %p191 = scmp.eq.s32.totalorder %s22, 1
      %p192 = por %p190, %p191
      %p193 = scmp.ne.s32.totalorder %s184, %s185
      %p194 = scmp.eq.s32.totalorder %s22, 0
      %p195 = por %p193, %p194
      %p196 = scmp.ne.s32.totalorder %s184, %s185
      %p197 = scmp.eq.s32.totalorder %s23, 1
      %p198 = por %p196, %p197
      %p200 = scmp.ne.s32.totalorder %s185, %s199
      %p201 = scmp.eq.s32.totalorder %s23, 0
      %p202 = por %p200, %p201
      %s203 = ssub.s32 %s17, %s24
      %p204 = scmp.eq.s32.totalorder %s203, 0
      %s206 = sadd.s32 %s205, 1
      %s207 = scalar_select %p204, %s205, %s206
      %p210 = pneg %p204
      %p211 = scmp.eq.s32.totalorder %s17, 1
      %p212 = por %p210, %p211
      %p213 = scmp.ne.s32.totalorder %s205, %s208
      %p214 = scmp.eq.s32.totalorder %s17, 0
      %p215 = por %p213, %p214
      %p216 = scmp.ne.s32.totalorder %s205, %s208
      %p217 = scmp.eq.s32.totalorder %s22, 1
      %p218 = por %p216, %p217
      %p219 = scmp.ne.s32.totalorder %s208, %s209
      %p220 = scmp.eq.s32.totalorder %s22, 0
      %p221 = por %p219, %p220
      %p222 = scmp.ne.s32.totalorder %s208, %s209
      %p223 = scmp.eq.s32.totalorder %s23, 1
      %p224 = por %p222, %p223
      %p226 = scmp.ne.s32.totalorder %s209, %s225
      %p227 = scmp.eq.s32.totalorder %s23, 0
      %p228 = por %p226, %p227
      %p229 = scmp.le.s32.totalorder 1, %s17
      %p230 = scmp.lt.s32.totalorder %s17, 3
      %p231 = pnand %p229, %p230
      %p232 = pneg %p231
      // Predicated region
      $region9: #{tpu_custom_call.1} parent=5 // pred_check
        _
      $region10: #{tpu_custom_call.1} parent=5 // pred_check_branch
        %234 = sbr.rel (%p231) target = $region12
      $region11: #{tpu_custom_call.1} parent=5 // pred_region
        %s235 = ssub.s32 %s17, 1
        // Predicated region
        $region13: #{tpu_custom_call.1} parent=11 // pred_check
          %p236 = pneg %p90
        $region14: #{tpu_custom_call.1} parent=11 // pred_check_branch
          %238 = sbr.rel (%p236) target = $region16
        $region15: #{tpu_custom_call.1} parent=11 // pred_region
          _
        $region16: #{tpu_custom_call.1} parent=11 // pred_fallthru
          _
        // Predicated region
        $region17: #{tpu_custom_call.1} parent=11 // pred_check
          %p239 = pneg %p111
        $region18: #{tpu_custom_call.1} parent=11 // pred_check_branch
          %241 = sbr.rel (%p239) target = $region20
        $region19: #{tpu_custom_call.1} parent=11 // pred_region
          _
        $region20: #{tpu_custom_call.1} parent=11 // pred_fallthru
          _
        // Predicated region
        $region21: #{tpu_custom_call.1} parent=11 // pred_check
          %p242 = pneg %p132
        $region22: #{tpu_custom_call.1} parent=11 // pred_check_branch
          %244 = sbr.rel (%p242) target = $region24
        $region23: #{tpu_custom_call.1} parent=11 // pred_region
          _
        $region24: #{tpu_custom_call.1} parent=11 // pred_fallthru
          _
        // Predicated region
        $region25: #{tpu_custom_call.1} parent=11 // pred_check
          %p245 = pneg %p153
        $region26: #{tpu_custom_call.1} parent=11 // pred_check_branch
          %247 = sbr.rel (%p245) target = $region28
        $region27: #{tpu_custom_call.1} parent=11 // pred_region
          _
        $region28: #{tpu_custom_call.1} parent=11 // pred_fallthru
          _
        // Predicated region
        $region29: #{tpu_custom_call.1} parent=11 // pred_check
          %p248 = pneg %p174
        $region30: #{tpu_custom_call.1} parent=11 // pred_check_branch
          %250 = sbr.rel (%p248) target = $region32
        $region31: #{tpu_custom_call.1} parent=11 // pred_region
          _
        $region32: #{tpu_custom_call.1} parent=11 // pred_fallthru
          _
        // Predicated region
        $region33: #{tpu_custom_call.1} parent=11 // pred_check
          %p251 = pneg %p195
        $region34: #{tpu_custom_call.1} parent=11 // pred_check_branch
          %253 = sbr.rel (%p251) target = $region36
        $region35: #{tpu_custom_call.1} parent=11 // pred_region
          _
        $region36: #{tpu_custom_call.1} parent=11 // pred_fallthru
          _
      $region12: #{tpu_custom_call.1} parent=5 // pred_fallthru
        _
      %p254 = scmp.lt.s32.totalorder %s17, 2
      // Predicated region
      $region37: #{tpu_custom_call.1} parent=5 // pred_check
        %p255 = pneg %p254
      $region38: #{tpu_custom_call.1} parent=5 // pred_check_branch
        %257 = sbr.rel (%p255) target = $region40
      $region39: #{tpu_custom_call.1} parent=5 // pred_region
        // Predicated region
        $region41: #{tpu_custom_call.1} parent=39 // pred_check
          %p258 = pneg %p37
        $region42: #{tpu_custom_call.1} parent=39 // pred_check_branch
          %260 = sbr.rel (%p258) target = $region44
        $region43: #{tpu_custom_call.1} parent=39 // pred_region
          %s261 = smul.u32 40, %s17
          %s262 = ssub.s32 75, %s261
          %p263 = scmp.lt.s32.totalorder %s262, 40
          %s264 = scalar_select %p263, %s262, 40
          %s265 = smul.u32 128, %s264
          %p266 = scmp.lt.s32.totalorder %s261, 74
          %s267 = scalar_select %p266, %s261, 74
          %s268 = smul.addr %s267, 8
          %s269 = scalar_lea.vmem %s0, %s268
          %s270 = smul.u32 40, %s17
          %s271 = ssub.s32 75, %s270
          %p272 = scmp.lt.s32.totalorder %s271, 40
          %s273 = scalar_select %p272, %s271, 40
          %s274 = smul.u32 128, %s273
        $region44: #{tpu_custom_call.1} parent=39 // pred_fallthru
          _
        // Predicated region
        $region45: #{tpu_custom_call.1} parent=39 // pred_check
          %p275 = pneg %p63
        $region46: #{tpu_custom_call.1} parent=39 // pred_check_branch
          %277 = sbr.rel (%p275) target = $region48
        $region47: #{tpu_custom_call.1} parent=39 // pred_region
          %s278 = smul.u32 40, %s17
          %s279 = ssub.s32 75, %s278
          %p280 = scmp.lt.s32.totalorder %s279, 40
          %s281 = scalar_select %p280, %s279, 40
          %s282 = smul.u32 128, %s281
          %p283 = scmp.lt.s32.totalorder %s278, 74
          %s284 = scalar_select %p283, %s278, 74
          %s285 = smul.addr %s284, 8
          %s286 = scalar_lea.vmem %s1, %s285
          %s287 = smul.u32 40, %s17
          %s288 = ssub.s32 75, %s287
          %p289 = scmp.lt.s32.totalorder %s288, 40
          %s290 = scalar_select %p289, %s288, 40
          %s291 = smul.u32 128, %s290
        $region48: #{tpu_custom_call.1} parent=39 // pred_fallthru
          _
      $region40: #{tpu_custom_call.1} parent=5 // pred_fallthru
        _
      %p292 = scmp.le.s32.totalorder 1, %s17
      %p293 = scmp.lt.s32.totalorder %s17, 3
      %p294 = pnand %p292, %p293
      %p295 = pneg %p294
      // Predicated region
      $region49: #{tpu_custom_call.1} parent=5 // pred_check
        _
      $region50: #{tpu_custom_call.1} parent=5 // pred_check_branch
        %297 = sbr.rel (%p294) target = $region52
      $region51: #{tpu_custom_call.1} parent=5 // pred_region
        %s298 = ssub.s32 %s17, 1
        %s299 = smul.u32 40, %s22
        %s300 = ssub.s32 75, %s299
        %p301 = scmp.lt.s32.totalorder %s300, 40
        %s302 = scalar_select %p301, %s300, 40
        %s303 = smul.u32 128, %s302
        %p304 = scmp.lt.s32.totalorder %s299, 74
        %s305 = scalar_select %p304, %s299, 74
        %s306 = smul.addr %s305, 8
        %s307 = scalar_lea.vmem %s0, %s306
        %p308 = pneg %p43
        %p309 = pneg %p40
        %s310 = smul.u32 40, %s22
        %s311 = ssub.s32 75, %s310
        %p312 = scmp.lt.s32.totalorder %s311, 40
        %s313 = scalar_select %p312, %s311, 40
        %s314 = smul.u32 128, %s313
        %p315 = scmp.lt.s32.totalorder %s310, 74
        %s316 = scalar_select %p315, %s310, 74
        %s317 = smul.addr %s316, 8
        %s318 = scalar_lea.vmem %s1, %s317
        %p319 = pneg %p69
        %p320 = pneg %p66
        %p321 = pneg %p90
        %p322 = pneg %p87
        %p323 = pneg %p111
        %p324 = pneg %p108
        %p325 = pneg %p132
        %p326 = pneg %p129
        %p327 = pneg %p153
        %p328 = pneg %p150
        %p329 = pneg %p174
        %p330 = pneg %p171
        %p331 = pneg %p195
        %p332 = pneg %p192
        %p333 = pneg %p221
        %p334 = pneg %p218
        %s335 = sand.u32 %s208, 1
        %s336 = scalar_lea.sflag [#allocation3], %s335
        %s337 = sand.u32 %s208, 1
        %s338 = smul.addr %s337, 320
        %s339 = scalar_lea.vmem [#allocation2], %s338
        %s340 = smul.u32 40, %s22
        %s341 = ssub.s32 75, %s340
        %p342 = scmp.lt.s32.totalorder %s341, 40
        %s343 = scalar_select %p342, %s341, 40
        %s344 = smul.u32 128, %s343
        %p345 = scmp.lt.s32.totalorder %s340, 74
        %s346 = scalar_select %p345, %s340, 74
        %s347 = smul.addr %s346, 8
        %s348 = scalar_lea.vmem %s0, %s347
        %s349 = smul.u32 40, %s22
        %s350 = ssub.s32 75, %s349
        %p351 = scmp.lt.s32.totalorder %s350, 40
        %s352 = scalar_select %p351, %s350, 40
        %s353 = smul.u32 128, %s352
        %s354 = smul.u32 40, %s22
        %s355 = ssub.s32 75, %s354
        %p356 = scmp.lt.s32.totalorder %s355, 40
        %s357 = scalar_select %p356, %s355, 40
        %s358 = smul.u32 128, %s357
        %p359 = scmp.lt.s32.totalorder %s354, 74
        %s360 = scalar_select %p359, %s354, 74
        %s361 = smul.addr %s360, 8
        %s362 = scalar_lea.vmem %s1, %s361
        %s363 = smul.u32 40, %s22
        %s364 = ssub.s32 75, %s363
        %p365 = scmp.lt.s32.totalorder %s364, 40
        %s366 = scalar_select %p365, %s364, 40
        %s367 = smul.u32 128, %s366
        %s368 = smul.u32 40, %s22
        %s369 = ssub.s32 75, %s368
        %p370 = scmp.lt.s32.totalorder %s369, 40
        %s371 = scalar_select %p370, %s369, 40
        %s372 = smul.u32 128, %s371
        %v374 = vld [vmem:[%s348] sm:$0xff]
        %v375 = vld [vmem:[%s348 + $0x8] sm:$0xff]
        %v376 = vld [vmem:[%s348 + $0x10] sm:$0xff]
        %v377 = vld [vmem:[%s348 + $0x18] sm:$0xff]
        %v378 = vld [vmem:[%s348 + $0x20] sm:$0xff]
        %v379 = vld [vmem:[%s348 + $0x28] sm:$0xff]
        %v380 = vld [vmem:[%s348 + $0x30] sm:$0xff]
        %v381 = vld [vmem:[%s348 + $0x38] sm:$0xff]
        %v382 = vld [vmem:[%s348 + $0x40] sm:$0xff]
        %v383 = vld [vmem:[%s348 + $0x48] sm:$0xff]
        %v384 = vld [vmem:[%s348 + $0x50] sm:$0xff]
        %v385 = vld [vmem:[%s348 + $0x58] sm:$0xff]
        %v386 = vld [vmem:[%s348 + $0x60] sm:$0xff]
        %v387 = vld [vmem:[%s348 + $0x68] sm:$0xff]
        %v388 = vld [vmem:[%s348 + $0x70] sm:$0xff]
        %v389 = vld [vmem:[%s348 + $0x78] sm:$0xff]
        %v390 = vld [vmem:[%s348 + $0x80] sm:$0xff]
        %v391 = vld [vmem:[%s348 + $0x88] sm:$0xff]
        %v392 = vld [vmem:[%s348 + $0x90] sm:$0xff]
        %v393 = vld [vmem:[%s348 + $0x98] sm:$0xff]
        %v394 = vld [vmem:[%s348 + $0xa0] sm:$0xff]
        %v395 = vld [vmem:[%s348 + $0xa8] sm:$0xff]
        %v396 = vld [vmem:[%s348 + $0xb0] sm:$0xff]
        %v397 = vld [vmem:[%s348 + $0xb8] sm:$0xff]
        %v398 = vld [vmem:[%s348 + $0xc0] sm:$0xff]
        %v399 = vld [vmem:[%s348 + $0xc8] sm:$0xff]
        %v400 = vld [vmem:[%s348 + $0xd0] sm:$0xff]
        %v401 = vld [vmem:[%s348 + $0xd8] sm:$0xff]
        %v402 = vld [vmem:[%s348 + $0xe0] sm:$0xff]
        %v403 = vld [vmem:[%s348 + $0xe8] sm:$0xff]
        %v404 = vld [vmem:[%s348 + $0xf0] sm:$0xff]
        %v405 = vld [vmem:[%s348 + $0xf8] sm:$0xff]
        %v406 = vld [vmem:[%s348 + $0x100] sm:$0xff]
        %v407 = vld [vmem:[%s348 + $0x108] sm:$0xff]
        %v408 = vld [vmem:[%s348 + $0x110] sm:$0xff]
        %v409 = vld [vmem:[%s348 + $0x118] sm:$0xff]
        %v410 = vld [vmem:[%s348 + $0x120] sm:$0xff]
        %v411 = vld [vmem:[%s348 + $0x128] sm:$0xff]
        %v412 = vld [vmem:[%s348 + $0x130] sm:$0xff]
        %v413 = vld [vmem:[%s348 + $0x138] sm:$0xff]
        %v414 = vpack.c.bf16 %v375, %v374
        %v415 = vpack.c.bf16 %v377, %v376
        %v416 = vpack.c.bf16 %v379, %v378
        %v417 = vpack.c.bf16 %v381, %v380
        %v418 = vpack.c.bf16 %v383, %v382
        %v419 = vpack.c.bf16 %v385, %v384
        %v420 = vpack.c.bf16 %v387, %v386
        %v421 = vpack.c.bf16 %v389, %v388
        %v422 = vpack.c.bf16 %v391, %v390
        %v423 = vpack.c.bf16 %v393, %v392
        %v424 = vpack.c.bf16 %v395, %v394
        %v425 = vpack.c.bf16 %v397, %v396
        %v426 = vpack.c.bf16 %v399, %v398
        %v427 = vpack.c.bf16 %v401, %v400
        %v428 = vpack.c.bf16 %v403, %v402
        %v429 = vpack.c.bf16 %v405, %v404
        %v430 = vpack.c.bf16 %v407, %v406
        %v431 = vpack.c.bf16 %v409, %v408
        %v432 = vpack.c.bf16 %v411, %v410
        %v433 = vpack.c.bf16 %v413, %v412
        %v434 = vld [vmem:[%s2] sm:$0xff]
        %v435 = vld [vmem:[%s2 + $0x8] sm:$0xff]
        %v436 = vld [vmem:[%s2 + $0x10] sm:$0xff]
        %v437 = vld [vmem:[%s2 + $0x18] sm:$0xff]
        %v438 = vld [vmem:[%s3] sm:$0x3]
        %v440 = vlaneseq
        %v441 = vshrl.u32 %v440, 7
        %v442 = vsub.s32 0, %v441
        %v443 = vrot.slane %v438, %v442
        %v444 = vlaneseq
        %v445 = vshrl.u32 %v444, 7
        %v446 = vsub.s32 1, %v445
        %v447 = vrot.slane %v438, %v446
        %v454 = vunpack.c.l.b16 %v434
        %v455 = vunpack.c.h.b16 %v434
        %v456 = vunpack.c.l.b16 %v435
        %v457 = vunpack.c.h.b16 %v435
        %v458 = vunpack.c.l.b16 %v436
        %v459 = vunpack.c.h.b16 %v436
        %v460 = vunpack.c.l.b16 %v437
        %v461 = vunpack.c.h.b16 %v437
        %v462 = vpack.c.b16 %v456, %v454
        %v463 = vpack.c.b16 %v457, %v455
        %v464 = vpack.c.b16 %v460, %v458
        %v465 = vpack.c.b16 %v461, %v459
        %vm470 = vcmask 261120
        %v472 = vsel %vm470, %v414, 0
        %v475 = vsel %vm470, %v415, 0
        %v478 = vsel %vm470, %v416, 0
        %v481 = vsel %vm470, %v417, 0
        %v484 = vsel %vm470, %v418, 0
        %v487 = vsel %vm470, %v419, 0
        %v490 = vsel %vm470, %v420, 0
        %v493 = vsel %vm470, %v421, 0
        %v496 = vsel %vm470, %v422, 0
        %v499 = vsel %vm470, %v423, 0
        %v502 = vsel %vm470, %v424, 0
        %v505 = vsel %vm470, %v425, 0
        %v508 = vsel %vm470, %v426, 0
        %v511 = vsel %vm470, %v427, 0
        %v514 = vsel %vm470, %v428, 0
        %v517 = vsel %vm470, %v429, 0
        %v520 = vsel %vm470, %v430, 0
        %v523 = vsel %vm470, %v431, 0
        %v526 = vsel %vm470, %v432, 0
        %v529 = vsel %vm470, %v433, 0
        %531 = vmatprep.subr.bf16.mxu0 %v463
        %532 = vmatpush1.bf16.msra.mxu0 %v462
        %533 = vmatprep.subr.bf16.mxu0 %v465
        %534 = vmatpush1.bf16.msra.mxu0 %v464
        %535 = vmatprep.subr.bf16.mxu0 0
        %536 = vmatpush1.bf16.msra.mxu0 0
        %537 = vmatprep.subr.bf16.mxu0 0
        %538 = vmatpush1.bf16.msra.mxu0 0
        %539 = vmatprep.subr.bf16.mxu0 0
        %540 = vmatpush1.bf16.msra.mxu0 0
        %541 = vmatprep.subr.bf16.mxu0 0
        %542 = vmatpush1.bf16.msra.mxu0 0
        %543 = vmatprep.subr.bf16.mxu0 0
        %544 = vmatpush1.bf16.msra.mxu0 0
        %545 = vmatprep.subr.bf16.mxu0 0
        %546 = vmatpush1.bf16.msra.mxu0 0
        %547 = vmatprep.subr.bf16.mxu0 0
        %548 = vmatpush1.bf16.msra.mxu0 0
        %549 = vmatprep.subr.bf16.mxu0 0
        %550 = vmatpush1.bf16.msra.mxu0 0
        %551 = vmatprep.subr.bf16.mxu0 0
        %552 = vmatpush1.bf16.msra.mxu0 0
        %553 = vmatprep.subr.bf16.mxu0 0
        %554 = vmatpush1.bf16.msra.mxu0 0
        %555 = vmatprep.subr.bf16.mxu0 0
        %556 = vmatpush1.bf16.msra.mxu0 0
        %557 = vmatprep.subr.bf16.mxu0 0
        %558 = vmatpush1.bf16.msra.mxu0 0
        %559 = vmatprep.subr.bf16.mxu0 0
        %560 = vmatpush1.bf16.msra.mxu0 0
        %561 = vmatprep.subr.bf16.mxu0 0
        %562 = vmatpush1.bf16.msra.mxu0 0
        %563 = vmatprep.mubr.bf16.mxu0 0
        %564 = vmatmul.mubr.bf16.gmra.mrb[0].mxu0 %v472
        %v565 = vpop.f32.mrb[0].mxu0
        %v566 = vadd.f32 %v443, %v565
        %v567 = vpop.f32.mrb[0].mxu0
        %v568 = vadd.f32 %v447, %v567
        %v569 = vpop.f32.mrb[0].mxu0
        %v570 = vadd.f32 %v443, %v569
        %v571 = vpop.f32.mrb[0].mxu0
        %v572 = vadd.f32 %v447, %v571
        %573 = vmatprep.mubr.bf16.mxu0 0
        %574 = vmatmul.mubr.bf16.gmra.mrb[0].mxu0 %v475
        %v575 = vpop.f32.mrb[0].mxu0
        %v576 = vadd.f32 %v443, %v575
        %v577 = vpop.f32.mrb[0].mxu0
        %v578 = vadd.f32 %v447, %v577
        %v579 = vpop.f32.mrb[0].mxu0
        %v580 = vadd.f32 %v443, %v579
        %v581 = vpop.f32.mrb[0].mxu0
        %v582 = vadd.f32 %v447, %v581
        %583 = vmatprep.mubr.bf16.mxu0 0
        %584 = vmatmul.mubr.bf16.gmra.mrb[0].mxu0 %v478
        %v585 = vpop.f32.mrb[0].mxu0
        %v586 = vadd.f32 %v443, %v585
        %v587 = vpop.f32.mrb[0].mxu0
        %v588 = vadd.f32 %v447, %v587
        %v589 = vpop.f32.mrb[0].mxu0
        %v590 = vadd.f32 %v443, %v589
        %v591 = vpop.f32.mrb[0].mxu0
        %v592 = vadd.f32 %v447, %v591
        %593 = vmatprep.mubr.bf16.mxu0 0
        %594 = vmatmul.mubr.bf16.gmra.mrb[0].mxu0 %v481
        %v595 = vpop.f32.mrb[0].mxu0
        %v596 = vadd.f32 %v443, %v595
        %v597 = vpop.f32.mrb[0].mxu0
        %v598 = vadd.f32 %v447, %v597
        %v599 = vpop.f32.mrb[0].mxu0
        %v600 = vadd.f32 %v443, %v599
        %v601 = vpop.f32.mrb[0].mxu0
        %v602 = vadd.f32 %v447, %v601
        %603 = vmatprep.mubr.bf16.mxu0 0
        %604 = vmatmul.mubr.bf16.gmra.mrb[0].mxu0 %v484
        %v605 = vpop.f32.mrb[0].mxu0
        %v606 = vadd.f32 %v443, %v605
        %v607 = vpop.f32.mrb[0].mxu0
        %v608 = vadd.f32 %v447, %v607
        %v609 = vpop.f32.mrb[0].mxu0
        %v610 = vadd.f32 %v443, %v609
        %v611 = vpop.f32.mrb[0].mxu0
        %v612 = vadd.f32 %v447, %v611
        %613 = vmatprep.mubr.bf16.mxu0 0
        %614 = vmatmul.mubr.bf16.gmra.mrb[0].mxu0 %v487
        %v615 = vpop.f32.mrb[0].mxu0
        %v616 = vadd.f32 %v443, %v615
        %v617 = vpop.f32.mrb[0].mxu0
        %v618 = vadd.f32 %v447, %v617
        %v619 = vpop.f32.mrb[0].mxu0
        %v620 = vadd.f32 %v443, %v619
        %v621 = vpop.f32.mrb[0].mxu0
        %v622 = vadd.f32 %v447, %v621
        %623 = vmatprep.mubr.bf16.mxu0 0
        %624 = vmatmul.mubr.bf16.gmra.mrb[0].mxu0 %v490
        %v625 = vpop.f32.mrb[0].mxu0
        %v626 = vadd.f32 %v443, %v625
        %v627 = vpop.f32.mrb[0].mxu0
        %v628 = vadd.f32 %v447, %v627
        %v629 = vpop.f32.mrb[0].mxu0
        %v630 = vadd.f32 %v443, %v629
        %v631 = vpop.f32.mrb[0].mxu0
        %v632 = vadd.f32 %v447, %v631
        %633 = vmatprep.mubr.bf16.mxu0 0
        %634 = vmatmul.mubr.bf16.gmra.mrb[0].mxu0 %v493
        %v635 = vpop.f32.mrb[0].mxu0
        %v636 = vadd.f32 %v443, %v635
        %v637 = vpop.f32.mrb[0].mxu0
        %v638 = vadd.f32 %v447, %v637
        %v639 = vpop.f32.mrb[0].mxu0
        %v640 = vadd.f32 %v443, %v639
        %v641 = vpop.f32.mrb[0].mxu0
        %v642 = vadd.f32 %v447, %v641
        %643 = vmatprep.mubr.bf16.mxu0 0
        %644 = vmatmul.mubr.bf16.gmra.mrb[0].mxu0 %v496
        %v645 = vpop.f32.mrb[0].mxu0
        %v646 = vadd.f32 %v443, %v645
        %v647 = vpop.f32.mrb[0].mxu0
        %v648 = vadd.f32 %v447, %v647
        %v649 = vpop.f32.mrb[0].mxu0
        %v650 = vadd.f32 %v443, %v649
        %v651 = vpop.f32.mrb[0].mxu0
        %v652 = vadd.f32 %v447, %v651
        %653 = vmatprep.mubr.bf16.mxu0 0
        %654 = vmatmul.mubr.bf16.gmra.mrb[0].mxu0 %v499
        %v655 = vpop.f32.mrb[0].mxu0
        %v656 = vadd.f32 %v443, %v655
        %v657 = vpop.f32.mrb[0].mxu0
        %v658 = vadd.f32 %v447, %v657
        %v659 = vpop.f32.mrb[0].mxu0
        %v660 = vadd.f32 %v443, %v659
        %v661 = vpop.f32.mrb[0].mxu0
        %v662 = vadd.f32 %v447, %v661
        %663 = vmatprep.mubr.bf16.mxu0 0
        %664 = vmatmul.mubr.bf16.gmra.mrb[0].mxu0 %v502
        %v665 = vpop.f32.mrb[0].mxu0
        %v666 = vadd.f32 %v443, %v665
        %v667 = vpop.f32.mrb[0].mxu0
        %v668 = vadd.f32 %v447, %v667
        %v669 = vpop.f32.mrb[0].mxu0
        %v670 = vadd.f32 %v443, %v669
        %v671 = vpop.f32.mrb[0].mxu0
        %v672 = vadd.f32 %v447, %v671
        %673 = vmatprep.mubr.bf16.mxu0 0
        %674 = vmatmul.mubr.bf16.gmra.mrb[0].mxu0 %v505
        %v675 = vpop.f32.mrb[0].mxu0
        %v676 = vadd.f32 %v443, %v675
        %v677 = vpop.f32.mrb[0].mxu0
        %v678 = vadd.f32 %v447, %v677
        %v679 = vpop.f32.mrb[0].mxu0
        %v680 = vadd.f32 %v443, %v679
        %v681 = vpop.f32.mrb[0].mxu0
        %v682 = vadd.f32 %v447, %v681
        %683 = vmatprep.mubr.bf16.mxu0 0
        %684 = vmatmul.mubr.bf16.gmra.mrb[0].mxu0 %v508
        %v685 = vpop.f32.mrb[0].mxu0
        %v686 = vadd.f32 %v443, %v685
        %v687 = vpop.f32.mrb[0].mxu0
        %v688 = vadd.f32 %v447, %v687
        %v689 = vpop.f32.mrb[0].mxu0
        %v690 = vadd.f32 %v443, %v689
        %v691 = vpop.f32.mrb[0].mxu0
        %v692 = vadd.f32 %v447, %v691
        %693 = vmatprep.mubr.bf16.mxu0 0
        %694 = vmatmul.mubr.bf16.gmra.mrb[0].mxu0 %v511
        %v695 = vpop.f32.mrb[0].mxu0
        %v696 = vadd.f32 %v443, %v695
        %v697 = vpop.f32.mrb[0].mxu0
        %v698 = vadd.f32 %v447, %v697
        %v699 = vpop.f32.mrb[0].mxu0
        %v700 = vadd.f32 %v443, %v699
        %v701 = vpop.f32.mrb[0].mxu0
        %v702 = vadd.f32 %v447, %v701
        %703 = vmatprep.mubr.bf16.mxu0 0
        %704 = vmatmul.mubr.bf16.gmra.mrb[0].mxu0 %v514
        %v705 = vpop.f32.mrb[0].mxu0
        %v706 = vadd.f32 %v443, %v705
        %v707 = vpop.f32.mrb[0].mxu0
        %v708 = vadd.f32 %v447, %v707
        %v709 = vpop.f32.mrb[0].mxu0
        %v710 = vadd.f32 %v443, %v709
        %v711 = vpop.f32.mrb[0].mxu0
        %v712 = vadd.f32 %v447, %v711
        %713 = vmatprep.mubr.bf16.mxu0 0
        %714 = vmatmul.mubr.bf16.gmra.mrb[0].mxu0 %v517
        %v715 = vpop.f32.mrb[0].mxu0
        %v716 = vadd.f32 %v443, %v715
        %v717 = vpop.f32.mrb[0].mxu0
        %v718 = vadd.f32 %v447, %v717
        %v719 = vpop.f32.mrb[0].mxu0
        %v720 = vadd.f32 %v443, %v719
        %v721 = vpop.f32.mrb[0].mxu0
        %v722 = vadd.f32 %v447, %v721
        %723 = vmatprep.mubr.bf16.mxu0 0
        %724 = vmatmul.mubr.bf16.gmra.mrb[0].mxu0 %v520
        %v725 = vpop.f32.mrb[0].mxu0
        %v726 = vadd.f32 %v443, %v725
        %v727 = vpop.f32.mrb[0].mxu0
        %v728 = vadd.f32 %v447, %v727
        %v729 = vpop.f32.mrb[0].mxu0
        %v730 = vadd.f32 %v443, %v729
        %v731 = vpop.f32.mrb[0].mxu0
        %v732 = vadd.f32 %v447, %v731
        %733 = vmatprep.mubr.bf16.mxu0 0
        %734 = vmatmul.mubr.bf16.gmra.mrb[0].mxu0 %v523
        %v735 = vpop.f32.mrb[0].mxu0
        %v736 = vadd.f32 %v443, %v735
        %v737 = vpop.f32.mrb[0].mxu0
        %v738 = vadd.f32 %v447, %v737
        %v739 = vpop.f32.mrb[0].mxu0
        %v740 = vadd.f32 %v443, %v739
        %v741 = vpop.f32.mrb[0].mxu0
        %v742 = vadd.f32 %v447, %v741
        %743 = vmatprep.mubr.bf16.mxu0 0
        %744 = vmatmul.mubr.bf16.gmra.mrb[0].mxu0 %v526
        %v745 = vpop.f32.mrb[0].mxu0
        %v746 = vadd.f32 %v443, %v745
        %v747 = vpop.f32.mrb[0].mxu0
        %v748 = vadd.f32 %v447, %v747
        %v749 = vpop.f32.mrb[0].mxu0
        %v750 = vadd.f32 %v443, %v749
        %v751 = vpop.f32.mrb[0].mxu0
        %v752 = vadd.f32 %v447, %v751
        %753 = vmatprep.mubr.bf16.mxu0 0
        %754 = vmatmul.mubr.bf16.gmra.mrb[0].mxu0 %v529
        %v755 = vpop.f32.mrb[0].mxu0
        %v756 = vadd.f32 %v443, %v755
        %v757 = vpop.f32.mrb[0].mxu0
        %v758 = vadd.f32 %v447, %v757
        %v759 = vpop.f32.mrb[0].mxu0
        %v760 = vadd.f32 %v443, %v759
        %v761 = vpop.f32.mrb[0].mxu0
        %v762 = vadd.f32 %v447, %v761
        %763 = vdwg.mxu0
        %764 = vmax.xlane.f32.xlu0 %v566
        %v765 = vpop.xlane.xlu0 %764
        %766 = vmax.xlane.f32.xlu0 %v570
        %v767 = vpop.xlane.xlu0 %766
        %768 = vmax.xlane.f32.xlu0 %v576
        %v769 = vpop.xlane.xlu0 %768
        %770 = vmax.xlane.f32.xlu0 %v580
        %v771 = vpop.xlane.xlu0 %770
        %772 = vmax.xlane.f32.xlu0 %v586
        %v773 = vpop.xlane.xlu0 %772
        %774 = vmax.xlane.f32.xlu0 %v590
        %v775 = vpop.xlane.xlu0 %774
        %776 = vmax.xlane.f32.xlu0 %v596
        %v777 = vpop.xlane.xlu0 %776
        %778 = vmax.xlane.f32.xlu0 %v600
        %v779 = vpop.xlane.xlu0 %778
        %780 = vmax.xlane.f32.xlu0 %v606
        %v781 = vpop.xlane.xlu0 %780
        %782 = vmax.xlane.f32.xlu0 %v610
        %v783 = vpop.xlane.xlu0 %782
        %784 = vmax.xlane.f32.xlu0 %v616
        %v785 = vpop.xlane.xlu0 %784
        %786 = vmax.xlane.f32.xlu0 %v620
        %v787 = vpop.xlane.xlu0 %786
        %788 = vmax.xlane.f32.xlu0 %v626
        %v789 = vpop.xlane.xlu0 %788
        %790 = vmax.xlane.f32.xlu0 %v630
        %v791 = vpop.xlane.xlu0 %790
        %792 = vmax.xlane.f32.xlu0 %v636
        %v793 = vpop.xlane.xlu0 %792
        %794 = vmax.xlane.f32.xlu0 %v640
        %v795 = vpop.xlane.xlu0 %794
        %796 = vmax.xlane.f32.xlu0 %v646
        %v797 = vpop.xlane.xlu0 %796
        %798 = vmax.xlane.f32.xlu0 %v650
        %v799 = vpop.xlane.xlu0 %798
        %800 = vmax.xlane.f32.xlu0 %v656
        %v801 = vpop.xlane.xlu0 %800
        %802 = vmax.xlane.f32.xlu0 %v660
        %v803 = vpop.xlane.xlu0 %802
        %804 = vmax.xlane.f32.xlu0 %v666
        %v805 = vpop.xlane.xlu0 %804
        %806 = vmax.xlane.f32.xlu0 %v670
        %v807 = vpop.xlane.xlu0 %806
        %808 = vmax.xlane.f32.xlu0 %v676
        %v809 = vpop.xlane.xlu0 %808
        %810 = vmax.xlane.f32.xlu0 %v680
        %v811 = vpop.xlane.xlu0 %810
        %812 = vmax.xlane.f32.xlu0 %v686
        %v813 = vpop.xlane.xlu0 %812
        %814 = vmax.xlane.f32.xlu0 %v690
        %v815 = vpop.xlane.xlu0 %814
        %816 = vmax.xlane.f32.xlu0 %v696
        %v817 = vpop.xlane.xlu0 %816
        %818 = vmax.xlane.f32.xlu0 %v700
        %v819 = vpop.xlane.xlu0 %818
        %820 = vmax.xlane.f32.xlu0 %v706
        %v821 = vpop.xlane.xlu0 %820
        %822 = vmax.xlane.f32.xlu0 %v710
        %v823 = vpop.xlane.xlu0 %822
        %824 = vmax.xlane.f32.xlu0 %v716
        %v825 = vpop.xlane.xlu0 %824
        %826 = vmax.xlane.f32.xlu0 %v720
        %v827 = vpop.xlane.xlu0 %826
        %828 = vmax.xlane.f32.xlu0 %v726
        %v829 = vpop.xlane.xlu0 %828
        %830 = vmax.xlane.f32.xlu0 %v730
        %v831 = vpop.xlane.xlu0 %830
        %832 = vmax.xlane.f32.xlu0 %v736
        %v833 = vpop.xlane.xlu0 %832
        %834 = vmax.xlane.f32.xlu0 %v740
        %v835 = vpop.xlane.xlu0 %834
        %836 = vmax.xlane.f32.xlu0 %v746
        %v837 = vpop.xlane.xlu0 %836
        %838 = vmax.xlane.f32.xlu0 %v750
        %v839 = vpop.xlane.xlu0 %838
        %840 = vmax.xlane.f32.xlu0 %v756
        %v841 = vpop.xlane.xlu0 %840
        %842 = vmax.xlane.f32.xlu0 %v760
        %v843 = vpop.xlane.xlu0 %842
        %v844 = vmax.f32 %v568, 0.0
        %v845 = vmax.f32 %v572, 0.0
        %v846 = vmax.f32 %v578, 0.0
        %v847 = vmax.f32 %v582, 0.0
        %v848 = vmax.f32 %v588, 0.0
        %v849 = vmax.f32 %v592, 0.0
        %v850 = vmax.f32 %v598, 0.0
        %v851 = vmax.f32 %v602, 0.0
        %v852 = vmax.f32 %v608, 0.0
        %v853 = vmax.f32 %v612, 0.0
        %v854 = vmax.f32 %v618, 0.0
        %v855 = vmax.f32 %v622, 0.0
        %v856 = vmax.f32 %v628, 0.0
        %v857 = vmax.f32 %v632, 0.0
        %v858 = vmax.f32 %v638, 0.0
        %v859 = vmax.f32 %v642, 0.0
        %v860 = vmax.f32 %v648, 0.0
        %v861 = vmax.f32 %v652, 0.0
        %v862 = vmax.f32 %v658, 0.0
        %v863 = vmax.f32 %v662, 0.0
        %v864 = vmax.f32 %v668, 0.0
        %v865 = vmax.f32 %v672, 0.0
        %v866 = vmax.f32 %v678, 0.0
        %v867 = vmax.f32 %v682, 0.0
        %v868 = vmax.f32 %v688, 0.0
        %v869 = vmax.f32 %v692, 0.0
        %v870 = vmax.f32 %v698, 0.0
        %v871 = vmax.f32 %v702, 0.0
        %v872 = vmax.f32 %v708, 0.0
        %v873 = vmax.f32 %v712, 0.0
        %v874 = vmax.f32 %v718, 0.0
        %v875 = vmax.f32 %v722, 0.0
        %v876 = vmax.f32 %v728, 0.0
        %v877 = vmax.f32 %v732, 0.0
        %v878 = vmax.f32 %v738, 0.0
        %v879 = vmax.f32 %v742, 0.0
        %v880 = vmax.f32 %v748, 0.0
        %v881 = vmax.f32 %v752, 0.0
        %v882 = vmax.f32 %v758, 0.0
        %v883 = vmax.f32 %v762, 0.0
        %v884 = vpack.c.bf16 %v845, %v844
        %v885 = vpack.c.bf16 %v847, %v846
        %v886 = vpack.c.bf16 %v849, %v848
        %v887 = vpack.c.bf16 %v851, %v850
        %v888 = vpack.c.bf16 %v853, %v852
        %v889 = vpack.c.bf16 %v855, %v854
        %v890 = vpack.c.bf16 %v857, %v856
        %v891 = vpack.c.bf16 %v859, %v858
        %v892 = vpack.c.bf16 %v861, %v860
        %v893 = vpack.c.bf16 %v863, %v862
        %v894 = vpack.c.bf16 %v865, %v864
        %v895 = vpack.c.bf16 %v867, %v866
        %v896 = vpack.c.bf16 %v869, %v868
        %v897 = vpack.c.bf16 %v871, %v870
        %v898 = vpack.c.bf16 %v873, %v872
        %v899 = vpack.c.bf16 %v875, %v874
        %v900 = vpack.c.bf16 %v877, %v876
        %v901 = vpack.c.bf16 %v879, %v878
        %v902 = vpack.c.bf16 %v881, %v880
        %v903 = vpack.c.bf16 %v883, %v882
        %v904 = vld [vmem:[%s4] sm:$0xf]
        %v905 = vld [vmem:[%s4 + $0x4] sm:$0xf]
        %v906 = vld [vmem:[%s4 + $0x8] sm:$0xf]
        %v907 = vld [vmem:[%s4 + $0xc] sm:$0xf]
        %v908 = vld [vmem:[%s5] sm:$0x1]
        %v910 = vlaneseq
        %v911 = vshrl.u32 %v910, 7
        %v912 = vsub.s32 0, %v911
        %v913 = vrot.slane %v908, %v912
        %v919 = vunpack.c.l.b16 %v904
        %v920 = vunpack.c.l.b16 %v905
        %v921 = vunpack.c.l.b16 %v906
        %v922 = vunpack.c.l.b16 %v907
        %v923 = vpack.c.b16 %v920, %v919
        %v924 = vpack.c.b16 %v922, %v921
        %v928 = vsel %vm470, %v884, 0
        %v931 = vsel %vm470, %v885, 0
        %v934 = vsel %vm470, %v886, 0
        %v937 = vsel %vm470, %v887, 0
        %v940 = vsel %vm470, %v888, 0
        %v943 = vsel %vm470, %v889, 0
        %v946 = vsel %vm470, %v890, 0
        %v949 = vsel %vm470, %v891, 0
        %v952 = vsel %vm470, %v892, 0
        %v955 = vsel %vm470, %v893, 0
        %v958 = vsel %vm470, %v894, 0
        %v961 = vsel %vm470, %v895, 0
        %v964 = vsel %vm470, %v896, 0
        %v967 = vsel %vm470, %v897, 0
        %v970 = vsel %vm470, %v898, 0
        %v973 = vsel %vm470, %v899, 0
        %v976 = vsel %vm470, %v900, 0
        %v979 = vsel %vm470, %v901, 0
        %v982 = vsel %vm470, %v902, 0
        %v985 = vsel %vm470, %v903, 0
        %987 = vmatprep.subr.bf16.mxu0 0
        %988 = vmatpush1.bf16.msra.mxu0 %v923
        %989 = vmatprep.subr.bf16.mxu0 0
        %990 = vmatpush1.bf16.msra.mxu0 %v924
        %991 = vmatprep.subr.bf16.mxu0 0
        %992 = vmatpush1.bf16.msra.mxu0 0
        %993 = vmatprep.subr.bf16.mxu0 0
        %994 = vmatpush1.bf16.msra.mxu0 0
        %995 = vmatprep.subr.bf16.mxu0 0
        %996 = vmatpush1.bf16.msra.mxu0 0
        %997 = vmatprep.subr.bf16.mxu0 0
        %998 = vmatpush1.bf16.msra.mxu0 0
        %999 = vmatprep.subr.bf16.mxu0 0
        %1000 = vmatpush1.bf16.msra.mxu0 0
        %1001 = vmatprep.subr.bf16.mxu0 0
        %1002 = vmatpush1.bf16.msra.mxu0 0
        %1003 = vmatprep.subr.bf16.mxu0 0
        %1004 = vmatpush1.bf16.msra.mxu0 0
        %1005 = vmatprep.subr.bf16.mxu0 0
        %1006 = vmatpush1.bf16.msra.mxu0 0
        %1007 = vmatprep.subr.bf16.mxu0 0
        %1008 = vmatpush1.bf16.msra.mxu0 0
        %1009 = vmatprep.subr.bf16.mxu0 0
        %1010 = vmatpush1.bf16.msra.mxu0 0
        %1011 = vmatprep.subr.bf16.mxu0 0
        %1012 = vmatpush1.bf16.msra.mxu0 0
        %1013 = vmatprep.subr.bf16.mxu0 0
        %1014 = vmatpush1.bf16.msra.mxu0 0
        %1015 = vmatprep.subr.bf16.mxu0 0
        %1016 = vmatpush1.bf16.msra.mxu0 0
        %1017 = vmatprep.subr.bf16.mxu0 0
        %1018 = vmatpush1.bf16.msra.mxu0 0
        %1019 = vmatprep.mubr.bf16.mxu0 0
        %1020 = vmatmul.mubr.bf16.gmra.mrb[0].mxu0 %v928
        %v1021 = vpop.f32.mrb[0].mxu0
        %v1022 = vadd.f32 %v913, %v1021
        %v1023 = vpop.f32.mrb[0].mxu0
        %v1024 = vpop.f32.mrb[0].mxu0
        %v1025 = vadd.f32 %v913, %v1024
        %v1026 = vpop.f32.mrb[0].mxu0
        %1027 = vmatprep.mubr.bf16.mxu0 0
        %1028 = vmatmul.mubr.bf16.gmra.mrb[0].mxu0 %v931
        %v1029 = vpop.f32.mrb[0].mxu0
        %v1030 = vadd.f32 %v913, %v1029
        %v1031 = vpop.f32.mrb[0].mxu0
        %v1032 = vpop.f32.mrb[0].mxu0
        %v1033 = vadd.f32 %v913, %v1032
        %v1034 = vpop.f32.mrb[0].mxu0
        %1035 = vmatprep.mubr.bf16.mxu0 0
        %1036 = vmatmul.mubr.bf16.gmra.mrb[0].mxu0 %v934
        %v1037 = vpop.f32.mrb[0].mxu0
        %v1038 = vadd.f32 %v913, %v1037
        %v1039 = vpop.f32.mrb[0].mxu0
        %v1040 = vpop.f32.mrb[0].mxu0
        %v1041 = vadd.f32 %v913, %v1040
        %v1042 = vpop.f32.mrb[0].mxu0
        %1043 = vmatprep.mubr.bf16.mxu0 0
        %1044 = vmatmul.mubr.bf16.gmra.mrb[0].mxu0 %v937
        %v1045 = vpop.f32.mrb[0].mxu0
        %v1046 = vadd.f32 %v913, %v1045
        %v1047 = vpop.f32.mrb[0].mxu0
        %v1048 = vpop.f32.mrb[0].mxu0
        %v1049 = vadd.f32 %v913, %v1048
        %v1050 = vpop.f32.mrb[0].mxu0
        %1051 = vmatprep.mubr.bf16.mxu0 0
        %1052 = vmatmul.mubr.bf16.gmra.mrb[0].mxu0 %v940
        %v1053 = vpop.f32.mrb[0].mxu0
        %v1054 = vadd.f32 %v913, %v1053
        %v1055 = vpop.f32.mrb[0].mxu0
        %v1056 = vpop.f32.mrb[0].mxu0
        %v1057 = vadd.f32 %v913, %v1056
        %v1058 = vpop.f32.mrb[0].mxu0
        %1059 = vmatprep.mubr.bf16.mxu0 0
        %1060 = vmatmul.mubr.bf16.gmra.mrb[0].mxu0 %v943
        %v1061 = vpop.f32.mrb[0].mxu0
        %v1062 = vadd.f32 %v913, %v1061
        %v1063 = vpop.f32.mrb[0].mxu0
        %v1064 = vpop.f32.mrb[0].mxu0
        %v1065 = vadd.f32 %v913, %v1064
        %v1066 = vpop.f32.mrb[0].mxu0
        %1067 = vmatprep.mubr.bf16.mxu0 0
        %1068 = vmatmul.mubr.bf16.gmra.mrb[0].mxu0 %v946
        %v1069 = vpop.f32.mrb[0].mxu0
        %v1070 = vadd.f32 %v913, %v1069
        %v1071 = vpop.f32.mrb[0].mxu0
        %v1072 = vpop.f32.mrb[0].mxu0
        %v1073 = vadd.f32 %v913, %v1072
        %v1074 = vpop.f32.mrb[0].mxu0
        %1075 = vmatprep.mubr.bf16.mxu0 0
        %1076 = vmatmul.mubr.bf16.gmra.mrb[0].mxu0 %v949
        %v1077 = vpop.f32.mrb[0].mxu0
        %v1078 = vadd.f32 %v913, %v1077
        %v1079 = vpop.f32.mrb[0].mxu0
        %v1080 = vpop.f32.mrb[0].mxu0
        %v1081 = vadd.f32 %v913, %v1080
        %v1082 = vpop.f32.mrb[0].mxu0
        %1083 = vmatprep.mubr.bf16.mxu0 0
        %1084 = vmatmul.mubr.bf16.gmra.mrb[0].mxu0 %v952
        %v1085 = vpop.f32.mrb[0].mxu0
        %v1086 = vadd.f32 %v913, %v1085
        %v1087 = vpop.f32.mrb[0].mxu0
        %v1088 = vpop.f32.mrb[0].mxu0
        %v1089 = vadd.f32 %v913, %v1088
        %v1090 = vpop.f32.mrb[0].mxu0
        %1091 = vmatprep.mubr.bf16.mxu0 0
        %1092 = vmatmul.mubr.bf16.gmra.mrb[0].mxu0 %v955
        %v1093 = vpop.f32.mrb[0].mxu0
        %v1094 = vadd.f32 %v913, %v1093
        %v1095 = vpop.f32.mrb[0].mxu0
        %v1096 = vpop.f32.mrb[0].mxu0
        %v1097 = vadd.f32 %v913, %v1096
        %v1098 = vpop.f32.mrb[0].mxu0
        %1099 = vmatprep.mubr.bf16.mxu0 0
        %1100 = vmatmul.mubr.bf16.gmra.mrb[0].mxu0 %v958
        %v1101 = vpop.f32.mrb[0].mxu0
        %v1102 = vadd.f32 %v913, %v1101
        %v1103 = vpop.f32.mrb[0].mxu0
        %v1104 = vpop.f32.mrb[0].mxu0
        %v1105 = vadd.f32 %v913, %v1104
        %v1106 = vpop.f32.mrb[0].mxu0
        %1107 = vmatprep.mubr.bf16.mxu0 0
        %1108 = vmatmul.mubr.bf16.gmra.mrb[0].mxu0 %v961
        %v1109 = vpop.f32.mrb[0].mxu0
        %v1110 = vadd.f32 %v913, %v1109
        %v1111 = vpop.f32.mrb[0].mxu0
        %v1112 = vpop.f32.mrb[0].mxu0
        %v1113 = vadd.f32 %v913, %v1112
        %v1114 = vpop.f32.mrb[0].mxu0
        %1115 = vmatprep.mubr.bf16.mxu0 0
        %1116 = vmatmul.mubr.bf16.gmra.mrb[0].mxu0 %v964
        %v1117 = vpop.f32.mrb[0].mxu0
        %v1118 = vadd.f32 %v913, %v1117
        %v1119 = vpop.f32.mrb[0].mxu0
        %v1120 = vpop.f32.mrb[0].mxu0
        %v1121 = vadd.f32 %v913, %v1120
        %v1122 = vpop.f32.mrb[0].mxu0
        %1123 = vmatprep.mubr.bf16.mxu0 0
        %1124 = vmatmul.mubr.bf16.gmra.mrb[0].mxu0 %v967
        %v1125 = vpop.f32.mrb[0].mxu0
        %v1126 = vadd.f32 %v913, %v1125
        %v1127 = vpop.f32.mrb[0].mxu0
        %v1128 = vpop.f32.mrb[0].mxu0
        %v1129 = vadd.f32 %v913, %v1128
        %v1130 = vpop.f32.mrb[0].mxu0
        %1131 = vmatprep.mubr.bf16.mxu0 0
        %1132 = vmatmul.mubr.bf16.gmra.mrb[0].mxu0 %v970
        %v1133 = vpop.f32.mrb[0].mxu0
        %v1134 = vadd.f32 %v913, %v1133
        %v1135 = vpop.f32.mrb[0].mxu0
        %v1136 = vpop.f32.mrb[0].mxu0
        %v1137 = vadd.f32 %v913, %v1136
        %v1138 = vpop.f32.mrb[0].mxu0
        %1139 = vmatprep.mubr.bf16.mxu0 0
        %1140 = vmatmul.mubr.bf16.gmra.mrb[0].mxu0 %v973
        %v1141 = vpop.f32.mrb[0].mxu0
        %v1142 = vadd.f32 %v913, %v1141
        %v1143 = vpop.f32.mrb[0].mxu0
        %v1144 = vpop.f32.mrb[0].mxu0
        %v1145 = vadd.f32 %v913, %v1144
        %v1146 = vpop.f32.mrb[0].mxu0
        %1147 = vmatprep.mubr.bf16.mxu0 0
        %1148 = vmatmul.mubr.bf16.gmra.mrb[0].mxu0 %v976
        %v1149 = vpop.f32.mrb[0].mxu0
        %v1150 = vadd.f32 %v913, %v1149
        %v1151 = vpop.f32.mrb[0].mxu0
        %v1152 = vpop.f32.mrb[0].mxu0
        %v1153 = vadd.f32 %v913, %v1152
        %v1154 = vpop.f32.mrb[0].mxu0
        %1155 = vmatprep.mubr.bf16.mxu0 0
        %1156 = vmatmul.mubr.bf16.gmra.mrb[0].mxu0 %v979
        %v1157 = vpop.f32.mrb[0].mxu0
        %v1158 = vadd.f32 %v913, %v1157
        %v1159 = vpop.f32.mrb[0].mxu0
        %v1160 = vpop.f32.mrb[0].mxu0
        %v1161 = vadd.f32 %v913, %v1160
        %v1162 = vpop.f32.mrb[0].mxu0
        %1163 = vmatprep.mubr.bf16.mxu0 0
        %1164 = vmatmul.mubr.bf16.gmra.mrb[0].mxu0 %v982
        %v1165 = vpop.f32.mrb[0].mxu0
        %v1166 = vadd.f32 %v913, %v1165
        %v1167 = vpop.f32.mrb[0].mxu0
        %v1168 = vpop.f32.mrb[0].mxu0
        %v1169 = vadd.f32 %v913, %v1168
        %v1170 = vpop.f32.mrb[0].mxu0
        %1171 = vmatprep.mubr.bf16.mxu0 0
        %1172 = vmatmul.mubr.bf16.gmra.mrb[0].mxu0 %v985
        %v1173 = vpop.f32.mrb[0].mxu0
        %v1174 = vadd.f32 %v913, %v1173
        %v1175 = vpop.f32.mrb[0].mxu0
        %v1176 = vpop.f32.mrb[0].mxu0
        %v1177 = vadd.f32 %v913, %v1176
        %v1178 = vpop.f32.mrb[0].mxu0
        %1179 = vdwg.mxu0
        %v1180 = vmax.f32 %v1022, 0.0
        %v1181 = vmax.f32 %v1025, 0.0
        %v1182 = vmax.f32 %v1030, 0.0
        %v1183 = vmax.f32 %v1033, 0.0
        %v1184 = vmax.f32 %v1038, 0.0
        %v1185 = vmax.f32 %v1041, 0.0
        %v1186 = vmax.f32 %v1046, 0.0
        %v1187 = vmax.f32 %v1049, 0.0
        %v1188 = vmax.f32 %v1054, 0.0
        %v1189 = vmax.f32 %v1057, 0.0
        %v1190 = vmax.f32 %v1062, 0.0
        %v1191 = vmax.f32 %v1065, 0.0
        %v1192 = vmax.f32 %v1070, 0.0
        %v1193 = vmax.f32 %v1073, 0.0
        %v1194 = vmax.f32 %v1078, 0.0
        %v1195 = vmax.f32 %v1081, 0.0
        %v1196 = vmax.f32 %v1086, 0.0
        %v1197 = vmax.f32 %v1089, 0.0
        %v1198 = vmax.f32 %v1094, 0.0
        %v1199 = vmax.f32 %v1097, 0.0
        %v1200 = vmax.f32 %v1102, 0.0
        %v1201 = vmax.f32 %v1105, 0.0
        %v1202 = vmax.f32 %v1110, 0.0
        %v1203 = vmax.f32 %v1113, 0.0
        %v1204 = vmax.f32 %v1118, 0.0
        %v1205 = vmax.f32 %v1121, 0.0
        %v1206 = vmax.f32 %v1126, 0.0
        %v1207 = vmax.f32 %v1129, 0.0
        %v1208 = vmax.f32 %v1134, 0.0
        %v1209 = vmax.f32 %v1137, 0.0
        %v1210 = vmax.f32 %v1142, 0.0
        %v1211 = vmax.f32 %v1145, 0.0
        %v1212 = vmax.f32 %v1150, 0.0
        %v1213 = vmax.f32 %v1153, 0.0
        %v1214 = vmax.f32 %v1158, 0.0
        %v1215 = vmax.f32 %v1161, 0.0
        %v1216 = vmax.f32 %v1166, 0.0
        %v1217 = vmax.f32 %v1169, 0.0
        %v1218 = vmax.f32 %v1174, 0.0
        %v1219 = vmax.f32 %v1177, 0.0
        %v1220 = vpack.c.bf16 %v1181, %v1180
        %v1221 = vpack.c.bf16 %v1183, %v1182
        %v1222 = vpack.c.bf16 %v1185, %v1184
        %v1223 = vpack.c.bf16 %v1187, %v1186
        %v1224 = vpack.c.bf16 %v1189, %v1188
        %v1225 = vpack.c.bf16 %v1191, %v1190
        %v1226 = vpack.c.bf16 %v1193, %v1192
        %v1227 = vpack.c.bf16 %v1195, %v1194
        %v1228 = vpack.c.bf16 %v1197, %v1196
        %v1229 = vpack.c.bf16 %v1199, %v1198
        %v1230 = vpack.c.bf16 %v1201, %v1200
        %v1231 = vpack.c.bf16 %v1203, %v1202
        %v1232 = vpack.c.bf16 %v1205, %v1204
        %v1233 = vpack.c.bf16 %v1207, %v1206
        %v1234 = vpack.c.bf16 %v1209, %v1208
        %v1235 = vpack.c.bf16 %v1211, %v1210
        %v1236 = vpack.c.bf16 %v1213, %v1212
        %v1237 = vpack.c.bf16 %v1215, %v1214
        %v1238 = vpack.c.bf16 %v1217, %v1216
        %v1239 = vpack.c.bf16 %v1219, %v1218
        %v1240 = vld [vmem:[%s6] sm:$0xf]
        %v1241 = vld [vmem:[%s6 + $0x4] sm:$0xf]
        %v1242 = vld [vmem:[%s6 + $0x8] sm:$0xf]
        %v1243 = vld [vmem:[%s6 + $0xc] sm:$0xf]
        %v1244 = vld [vmem:[%s7] sm:$0x1]
        %v1246 = vlaneseq
        %v1247 = vshrl.u32 %v1246, 7
        %v1248 = vsub.s32 0, %v1247
        %v1249 = vrot.slane %v1244, %v1248
        %v1255 = vunpack.c.l.b16 %v1240
        %v1256 = vunpack.c.l.b16 %v1241
        %v1257 = vunpack.c.l.b16 %v1242
        %v1258 = vunpack.c.l.b16 %v1243
        %v1259 = vpack.c.b16 %v1256, %v1255
        %v1260 = vpack.c.b16 %v1258, %v1257
        %v1264 = vsel %vm470, %v1220, 0
        %v1267 = vsel %vm470, %v1221, 0
        %v1270 = vsel %vm470, %v1222, 0
        %v1273 = vsel %vm470, %v1223, 0
        %v1276 = vsel %vm470, %v1224, 0
        %v1279 = vsel %vm470, %v1225, 0
        %v1282 = vsel %vm470, %v1226, 0
        %v1285 = vsel %vm470, %v1227, 0
        %v1288 = vsel %vm470, %v1228, 0
        %v1291 = vsel %vm470, %v1229, 0
        %v1294 = vsel %vm470, %v1230, 0
        %v1297 = vsel %vm470, %v1231, 0
        %v1300 = vsel %vm470, %v1232, 0
        %v1303 = vsel %vm470, %v1233, 0
        %v1306 = vsel %vm470, %v1234, 0
        %v1309 = vsel %vm470, %v1235, 0
        %v1312 = vsel %vm470, %v1236, 0
        %v1315 = vsel %vm470, %v1237, 0
        %v1318 = vsel %vm470, %v1238, 0
        %v1321 = vsel %vm470, %v1239, 0
        %1323 = vmatprep.subr.bf16.mxu0 0
        %1324 = vmatpush1.bf16.msra.mxu0 %v1259
        %1325 = vmatprep.subr.bf16.mxu0 0
        %1326 = vmatpush1.bf16.msra.mxu0 %v1260
        %1327 = vmatprep.subr.bf16.mxu0 0
        %1328 = vmatpush1.bf16.msra.mxu0 0
        %1329 = vmatprep.subr.bf16.mxu0 0
        %1330 = vmatpush1.bf16.msra.mxu0 0
        %1331 = vmatprep.subr.bf16.mxu0 0
        %1332 = vmatpush1.bf16.msra.mxu0 0
        %1333 = vmatprep.subr.bf16.mxu0 0
        %1334 = vmatpush1.bf16.msra.mxu0 0
        %1335 = vmatprep.subr.bf16.mxu0 0
        %1336 = vmatpush1.bf16.msra.mxu0 0
        %1337 = vmatprep.subr.bf16.mxu0 0
        %1338 = vmatpush1.bf16.msra.mxu0 0
        %1339 = vmatprep.subr.bf16.mxu0 0
        %1340 = vmatpush1.bf16.msra.mxu0 0
        %1341 = vmatprep.subr.bf16.mxu0 0
        %1342 = vmatpush1.bf16.msra.mxu0 0
        %1343 = vmatprep.subr.bf16.mxu0 0
        %1344 = vmatpush1.bf16.msra.mxu0 0
        %1345 = vmatprep.subr.bf16.mxu0 0
        %1346 = vmatpush1.bf16.msra.mxu0 0
        %1347 = vmatprep.subr.bf16.mxu0 0
        %1348 = vmatpush1.bf16.msra.mxu0 0
        %1349 = vmatprep.subr.bf16.mxu0 0
        %1350 = vmatpush1.bf16.msra.mxu0 0
        %1351 = vmatprep.subr.bf16.mxu0 0
        %1352 = vmatpush1.bf16.msra.mxu0 0
        %1353 = vmatprep.subr.bf16.mxu0 0
        %1354 = vmatpush1.bf16.msra.mxu0 0
        %1355 = vmatprep.mubr.bf16.mxu0 0
        %1356 = vmatmul.mubr.bf16.gmra.mrb[0].mxu0 %v1264
        %v1357 = vpop.f32.mrb[0].mxu0
        %v1358 = vadd.f32 %v1249, %v1357
        %v1359 = vpop.f32.mrb[0].mxu0
        %v1360 = vpop.f32.mrb[0].mxu0
        %v1361 = vadd.f32 %v1249, %v1360
        %v1362 = vpop.f32.mrb[0].mxu0
        %1363 = vmatprep.mubr.bf16.mxu0 0
        %1364 = vmatmul.mubr.bf16.gmra.mrb[0].mxu0 %v1267
        %v1365 = vpop.f32.mrb[0].mxu0
        %v1366 = vadd.f32 %v1249, %v1365
        %v1367 = vpop.f32.mrb[0].mxu0
        %v1368 = vpop.f32.mrb[0].mxu0
        %v1369 = vadd.f32 %v1249, %v1368
        %v1370 = vpop.f32.mrb[0].mxu0
        %1371 = vmatprep.mubr.bf16.mxu0 0
        %1372 = vmatmul.mubr.bf16.gmra.mrb[0].mxu0 %v1270
        %v1373 = vpop.f32.mrb[0].mxu0
        %v1374 = vadd.f32 %v1249, %v1373
        %v1375 = vpop.f32.mrb[0].mxu0
        %v1376 = vpop.f32.mrb[0].mxu0
        %v1377 = vadd.f32 %v1249, %v1376
        %v1378 = vpop.f32.mrb[0].mxu0
        %1379 = vmatprep.mubr.bf16.mxu0 0
        %1380 = vmatmul.mubr.bf16.gmra.mrb[0].mxu0 %v1273
        %v1381 = vpop.f32.mrb[0].mxu0
        %v1382 = vadd.f32 %v1249, %v1381
        %v1383 = vpop.f32.mrb[0].mxu0
        %v1384 = vpop.f32.mrb[0].mxu0
        %v1385 = vadd.f32 %v1249, %v1384
        %v1386 = vpop.f32.mrb[0].mxu0
        %1387 = vmatprep.mubr.bf16.mxu0 0
        %1388 = vmatmul.mubr.bf16.gmra.mrb[0].mxu0 %v1276
        %v1389 = vpop.f32.mrb[0].mxu0
        %v1390 = vadd.f32 %v1249, %v1389
        %v1391 = vpop.f32.mrb[0].mxu0
        %v1392 = vpop.f32.mrb[0].mxu0
        %v1393 = vadd.f32 %v1249, %v1392
        %v1394 = vpop.f32.mrb[0].mxu0
        %1395 = vmatprep.mubr.bf16.mxu0 0
        %1396 = vmatmul.mubr.bf16.gmra.mrb[0].mxu0 %v1279
        %v1397 = vpop.f32.mrb[0].mxu0
        %v1398 = vadd.f32 %v1249, %v1397
        %v1399 = vpop.f32.mrb[0].mxu0
        %v1400 = vpop.f32.mrb[0].mxu0
        %v1401 = vadd.f32 %v1249, %v1400
        %v1402 = vpop.f32.mrb[0].mxu0
        %1403 = vmatprep.mubr.bf16.mxu0 0
        %1404 = vmatmul.mubr.bf16.gmra.mrb[0].mxu0 %v1282
        %v1405 = vpop.f32.mrb[0].mxu0
        %v1406 = vadd.f32 %v1249, %v1405
        %v1407 = vpop.f32.mrb[0].mxu0
        %v1408 = vpop.f32.mrb[0].mxu0
        %v1409 = vadd.f32 %v1249, %v1408
        %v1410 = vpop.f32.mrb[0].mxu0
        %1411 = vmatprep.mubr.bf16.mxu0 0
        %1412 = vmatmul.mubr.bf16.gmra.mrb[0].mxu0 %v1285
        %v1413 = vpop.f32.mrb[0].mxu0
        %v1414 = vadd.f32 %v1249, %v1413
        %v1415 = vpop.f32.mrb[0].mxu0
        %v1416 = vpop.f32.mrb[0].mxu0
        %v1417 = vadd.f32 %v1249, %v1416
        %v1418 = vpop.f32.mrb[0].mxu0
        %1419 = vmatprep.mubr.bf16.mxu0 0
        %1420 = vmatmul.mubr.bf16.gmra.mrb[0].mxu0 %v1288
        %v1421 = vpop.f32.mrb[0].mxu0
        %v1422 = vadd.f32 %v1249, %v1421
        %v1423 = vpop.f32.mrb[0].mxu0
        %v1424 = vpop.f32.mrb[0].mxu0
        %v1425 = vadd.f32 %v1249, %v1424
        %v1426 = vpop.f32.mrb[0].mxu0
        %1427 = vmatprep.mubr.bf16.mxu0 0
        %1428 = vmatmul.mubr.bf16.gmra.mrb[0].mxu0 %v1291
        %v1429 = vpop.f32.mrb[0].mxu0
        %v1430 = vadd.f32 %v1249, %v1429
        %v1431 = vpop.f32.mrb[0].mxu0
        %v1432 = vpop.f32.mrb[0].mxu0
        %v1433 = vadd.f32 %v1249, %v1432
        %v1434 = vpop.f32.mrb[0].mxu0
        %1435 = vmatprep.mubr.bf16.mxu0 0
        %1436 = vmatmul.mubr.bf16.gmra.mrb[0].mxu0 %v1294
        %v1437 = vpop.f32.mrb[0].mxu0
        %v1438 = vadd.f32 %v1249, %v1437
        %v1439 = vpop.f32.mrb[0].mxu0
        %v1440 = vpop.f32.mrb[0].mxu0
        %v1441 = vadd.f32 %v1249, %v1440
        %v1442 = vpop.f32.mrb[0].mxu0
        %1443 = vmatprep.mubr.bf16.mxu0 0
        %1444 = vmatmul.mubr.bf16.gmra.mrb[0].mxu0 %v1297
        %v1445 = vpop.f32.mrb[0].mxu0
        %v1446 = vadd.f32 %v1249, %v1445
        %v1447 = vpop.f32.mrb[0].mxu0
        %v1448 = vpop.f32.mrb[0].mxu0
        %v1449 = vadd.f32 %v1249, %v1448
        %v1450 = vpop.f32.mrb[0].mxu0
        %1451 = vmatprep.mubr.bf16.mxu0 0
        %1452 = vmatmul.mubr.bf16.gmra.mrb[0].mxu0 %v1300
        %v1453 = vpop.f32.mrb[0].mxu0
        %v1454 = vadd.f32 %v1249, %v1453
        %v1455 = vpop.f32.mrb[0].mxu0
        %v1456 = vpop.f32.mrb[0].mxu0
        %v1457 = vadd.f32 %v1249, %v1456
        %v1458 = vpop.f32.mrb[0].mxu0
        %1459 = vmatprep.mubr.bf16.mxu0 0
        %1460 = vmatmul.mubr.bf16.gmra.mrb[0].mxu0 %v1303
        %v1461 = vpop.f32.mrb[0].mxu0
        %v1462 = vadd.f32 %v1249, %v1461
        %v1463 = vpop.f32.mrb[0].mxu0
        %v1464 = vpop.f32.mrb[0].mxu0
        %v1465 = vadd.f32 %v1249, %v1464
        %v1466 = vpop.f32.mrb[0].mxu0
        %1467 = vmatprep.mubr.bf16.mxu0 0
        %1468 = vmatmul.mubr.bf16.gmra.mrb[0].mxu0 %v1306
        %v1469 = vpop.f32.mrb[0].mxu0
        %v1470 = vadd.f32 %v1249, %v1469
        %v1471 = vpop.f32.mrb[0].mxu0
        %v1472 = vpop.f32.mrb[0].mxu0
        %v1473 = vadd.f32 %v1249, %v1472
        %v1474 = vpop.f32.mrb[0].mxu0
        %1475 = vmatprep.mubr.bf16.mxu0 0
        %1476 = vmatmul.mubr.bf16.gmra.mrb[0].mxu0 %v1309
        %v1477 = vpop.f32.mrb[0].mxu0
        %v1478 = vadd.f32 %v1249, %v1477
        %v1479 = vpop.f32.mrb[0].mxu0
        %v1480 = vpop.f32.mrb[0].mxu0
        %v1481 = vadd.f32 %v1249, %v1480
        %v1482 = vpop.f32.mrb[0].mxu0
        %1483 = vmatprep.mubr.bf16.mxu0 0
        %1484 = vmatmul.mubr.bf16.gmra.mrb[0].mxu0 %v1312
        %v1485 = vpop.f32.mrb[0].mxu0
        %v1486 = vadd.f32 %v1249, %v1485
        %v1487 = vpop.f32.mrb[0].mxu0
        %v1488 = vpop.f32.mrb[0].mxu0
        %v1489 = vadd.f32 %v1249, %v1488
        %v1490 = vpop.f32.mrb[0].mxu0
        %1491 = vmatprep.mubr.bf16.mxu0 0
        %1492 = vmatmul.mubr.bf16.gmra.mrb[0].mxu0 %v1315
        %v1493 = vpop.f32.mrb[0].mxu0
        %v1494 = vadd.f32 %v1249, %v1493
        %v1495 = vpop.f32.mrb[0].mxu0
        %v1496 = vpop.f32.mrb[0].mxu0
        %v1497 = vadd.f32 %v1249, %v1496
        %v1498 = vpop.f32.mrb[0].mxu0
        %1499 = vmatprep.mubr.bf16.mxu0 0
        %1500 = vmatmul.mubr.bf16.gmra.mrb[0].mxu0 %v1318
        %v1501 = vpop.f32.mrb[0].mxu0
        %v1502 = vadd.f32 %v1249, %v1501
        %v1503 = vpop.f32.mrb[0].mxu0
        %v1504 = vpop.f32.mrb[0].mxu0
        %v1505 = vadd.f32 %v1249, %v1504
        %v1506 = vpop.f32.mrb[0].mxu0
        %1507 = vmatprep.mubr.bf16.mxu0 0
        %1508 = vmatmul.mubr.bf16.gmra.mrb[0].mxu0 %v1321
        %v1509 = vpop.f32.mrb[0].mxu0
        %v1510 = vadd.f32 %v1249, %v1509
        %v1511 = vpop.f32.mrb[0].mxu0
        %v1512 = vpop.f32.mrb[0].mxu0
        %v1513 = vadd.f32 %v1249, %v1512
        %v1514 = vpop.f32.mrb[0].mxu0
        %1515 = vdwg.mxu0
        %v1516 = vld [vmem:[%s362] sm:$0xff]
        %v1517 = vld [vmem:[%s362 + $0x8] sm:$0xff]
        %v1518 = vld [vmem:[%s362 + $0x10] sm:$0xff]
        %v1519 = vld [vmem:[%s362 + $0x18] sm:$0xff]
        %v1520 = vld [vmem:[%s362 + $0x20] sm:$0xff]
        %v1521 = vld [vmem:[%s362 + $0x28] sm:$0xff]
        %v1522 = vld [vmem:[%s362 + $0x30] sm:$0xff]
        %v1523 = vld [vmem:[%s362 + $0x38] sm:$0xff]
        %v1524 = vld [vmem:[%s362 + $0x40] sm:$0xff]
        %v1525 = vld [vmem:[%s362 + $0x48] sm:$0xff]
        %v1526 = vld [vmem:[%s362 + $0x50] sm:$0xff]
        %v1527 = vld [vmem:[%s362 + $0x58] sm:$0xff]
        %v1528 = vld [vmem:[%s362 + $0x60] sm:$0xff]
        %v1529 = vld [vmem:[%s362 + $0x68] sm:$0xff]
        %v1530 = vld [vmem:[%s362 + $0x70] sm:$0xff]
        %v1531 = vld [vmem:[%s362 + $0x78] sm:$0xff]
        %v1532 = vld [vmem:[%s362 + $0x80] sm:$0xff]
        %v1533 = vld [vmem:[%s362 + $0x88] sm:$0xff]
        %v1534 = vld [vmem:[%s362 + $0x90] sm:$0xff]
        %v1535 = vld [vmem:[%s362 + $0x98] sm:$0xff]
        %v1536 = vld [vmem:[%s362 + $0xa0] sm:$0xff]
        %v1537 = vld [vmem:[%s362 + $0xa8] sm:$0xff]
        %v1538 = vld [vmem:[%s362 + $0xb0] sm:$0xff]
        %v1539 = vld [vmem:[%s362 + $0xb8] sm:$0xff]
        %v1540 = vld [vmem:[%s362 + $0xc0] sm:$0xff]
        %v1541 = vld [vmem:[%s362 + $0xc8] sm:$0xff]
        %v1542 = vld [vmem:[%s362 + $0xd0] sm:$0xff]
        %v1543 = vld [vmem:[%s362 + $0xd8] sm:$0xff]
        %v1544 = vld [vmem:[%s362 + $0xe0] sm:$0xff]
        %v1545 = vld [vmem:[%s362 + $0xe8] sm:$0xff]
        %v1546 = vld [vmem:[%s362 + $0xf0] sm:$0xff]
        %v1547 = vld [vmem:[%s362 + $0xf8] sm:$0xff]
        %v1548 = vld [vmem:[%s362 + $0x100] sm:$0xff]
        %v1549 = vld [vmem:[%s362 + $0x108] sm:$0xff]
        %v1550 = vld [vmem:[%s362 + $0x110] sm:$0xff]
        %v1551 = vld [vmem:[%s362 + $0x118] sm:$0xff]
        %v1552 = vld [vmem:[%s362 + $0x120] sm:$0xff]
        %v1553 = vld [vmem:[%s362 + $0x128] sm:$0xff]
        %v1554 = vld [vmem:[%s362 + $0x130] sm:$0xff]
        %v1555 = vld [vmem:[%s362 + $0x138] sm:$0xff]
        %v1556 = vlaneseq
        %v1557 = vand.u32 %v1556, 127
        %v1558 = vsub.s32 %v1557, 8
        %vm1559 = vcmp.eq.s32.totalorder %v1558, 0
        %vm1560 = vcmp.eq.s32.totalorder %v1558, 2
        %vm1561 = vmor %vm1559, %vm1560
        %vm1562 = vcmp.eq.s32.totalorder %v1558, 1
        %vm1563 = vcmp.eq.s32.totalorder %v1558, 3
        %vm1564 = vmor %vm1562, %vm1563
        %vm1565 = vmor %vm1560, %vm1563
        %v1566 = vsel %vm1565, %v1358, 0.0
        %v1567 = vsel %vm1565, %v1361, 0.0
        %v1568 = vsel %vm1565, %v1366, 0.0
        %v1569 = vsel %vm1565, %v1369, 0.0
        %v1570 = vsel %vm1565, %v1374, 0.0
        %v1571 = vsel %vm1565, %v1377, 0.0
        %v1572 = vsel %vm1565, %v1382, 0.0
        %v1573 = vsel %vm1565, %v1385, 0.0
        %v1574 = vsel %vm1565, %v1390, 0.0
        %v1575 = vsel %vm1565, %v1393, 0.0
        %v1576 = vsel %vm1565, %v1398, 0.0
        %v1577 = vsel %vm1565, %v1401, 0.0
        %v1578 = vsel %vm1565, %v1406, 0.0
        %v1579 = vsel %vm1565, %v1409, 0.0
        %v1580 = vsel %vm1565, %v1414, 0.0
        %v1581 = vsel %vm1565, %v1417, 0.0
        %v1582 = vsel %vm1565, %v1422, 0.0
        %v1583 = vsel %vm1565, %v1425, 0.0
        %v1584 = vsel %vm1565, %v1430, 0.0
        %v1585 = vsel %vm1565, %v1433, 0.0
        %v1586 = vsel %vm1565, %v1438, 0.0
        %v1587 = vsel %vm1565, %v1441, 0.0
        %v1588 = vsel %vm1565, %v1446, 0.0
        %v1589 = vsel %vm1565, %v1449, 0.0
        %v1590 = vsel %vm1565, %v1454, 0.0
        %v1591 = vsel %vm1565, %v1457, 0.0
        %v1592 = vsel %vm1565, %v1462, 0.0
        %v1593 = vsel %vm1565, %v1465, 0.0
        %v1594 = vsel %vm1565, %v1470, 0.0
        %v1595 = vsel %vm1565, %v1473, 0.0
        %v1596 = vsel %vm1565, %v1478, 0.0
        %v1597 = vsel %vm1565, %v1481, 0.0
        %v1598 = vsel %vm1565, %v1486, 0.0
        %v1599 = vsel %vm1565, %v1489, 0.0
        %v1600 = vsel %vm1565, %v1494, 0.0
        %v1601 = vsel %vm1565, %v1497, 0.0
        %v1602 = vsel %vm1565, %v1502, 0.0
        %v1603 = vsel %vm1565, %v1505, 0.0
        %v1604 = vsel %vm1565, %v1510, 0.0
        %v1605 = vsel %vm1565, %v1513, 0.0
        %v1606 = vmul.f32 %v1566, 1.442695
        %v1607 = vpow.pop %v1606
        %v1608 = vmul.f32 %v1567, 1.442695
        %v1609 = vpow.pop %v1608
        %v1610 = vmul.f32 %v1568, 1.442695
        %v1611 = vpow.pop %v1610
        %v1612 = vmul.f32 %v1569, 1.442695
        %v1613 = vpow.pop %v1612
        %v1614 = vmul.f32 %v1570, 1.442695
        %v1615 = vpow.pop %v1614
        %v1616 = vmul.f32 %v1571, 1.442695
        %v1617 = vpow.pop %v1616
        %v1618 = vmul.f32 %v1572, 1.442695
        %v1619 = vpow.pop %v1618
        %v1620 = vmul.f32 %v1573, 1.442695
        %v1621 = vpow.pop %v1620
        %v1622 = vmul.f32 %v1574, 1.442695
        %v1623 = vpow.pop %v1622
        %v1624 = vmul.f32 %v1575, 1.442695
        %v1625 = vpow.pop %v1624
        %v1626 = vmul.f32 %v1576, 1.442695
        %v1627 = vpow.pop %v1626
        %v1628 = vmul.f32 %v1577, 1.442695
        %v1629 = vpow.pop %v1628
        %v1630 = vmul.f32 %v1578, 1.442695
        %v1631 = vpow.pop %v1630
        %v1632 = vmul.f32 %v1579, 1.442695
        %v1633 = vpow.pop %v1632
        %v1634 = vmul.f32 %v1580, 1.442695
        %v1635 = vpow.pop %v1634
        %v1636 = vmul.f32 %v1581, 1.442695
        %v1637 = vpow.pop %v1636
        %v1638 = vmul.f32 %v1582, 1.442695
        %v1639 = vpow.pop %v1638
        %v1640 = vmul.f32 %v1583, 1.442695
        %v1641 = vpow.pop %v1640
        %v1642 = vmul.f32 %v1584, 1.442695
        %v1643 = vpow.pop %v1642
        %v1644 = vmul.f32 %v1585, 1.442695
        %v1645 = vpow.pop %v1644
        %v1646 = vmul.f32 %v1586, 1.442695
        %v1647 = vpow.pop %v1646
        %v1648 = vmul.f32 %v1587, 1.442695
        %v1649 = vpow.pop %v1648
        %v1650 = vmul.f32 %v1588, 1.442695
        %v1651 = vpow.pop %v1650
        %v1652 = vmul.f32 %v1589, 1.442695
        %v1653 = vpow.pop %v1652
        %v1654 = vmul.f32 %v1590, 1.442695
        %v1655 = vpow.pop %v1654
        %v1656 = vmul.f32 %v1591, 1.442695
        %v1657 = vpow.pop %v1656
        %v1658 = vmul.f32 %v1592, 1.442695
        %v1659 = vpow.pop %v1658
        %v1660 = vmul.f32 %v1593, 1.442695
        %v1661 = vpow.pop %v1660
        %v1662 = vmul.f32 %v1594, 1.442695
        %v1663 = vpow.pop %v1662
        %v1664 = vmul.f32 %v1595, 1.442695
        %v1665 = vpow.pop %v1664
        %v1666 = vmul.f32 %v1596, 1.442695
        %v1667 = vpow.pop %v1666
        %v1668 = vmul.f32 %v1597, 1.442695
        %v1669 = vpow.pop %v1668
        %v1670 = vmul.f32 %v1598, 1.442695
        %v1671 = vpow.pop %v1670
        %v1672 = vmul.f32 %v1599, 1.442695
        %v1673 = vpow.pop %v1672
        %v1674 = vmul.f32 %v1600, 1.442695
        %v1675 = vpow.pop %v1674
        %v1676 = vmul.f32 %v1601, 1.442695
        %v1677 = vpow.pop %v1676
        %v1678 = vmul.f32 %v1602, 1.442695
        %v1679 = vpow.pop %v1678
        %v1680 = vmul.f32 %v1603, 1.442695
        %v1681 = vpow.pop %v1680
        %v1682 = vmul.f32 %v1604, 1.442695
        %v1683 = vpow.pop %v1682
        %v1684 = vmul.f32 %v1605, 1.442695
        %v1685 = vpow.pop %v1684
        %v1686 = vsel %vm1565, %v1607, %v1358
        %v1687 = vsel %vm1565, %v1609, %v1361
        %v1688 = vsel %vm1565, %v1611, %v1366
        %v1689 = vsel %vm1565, %v1613, %v1369
        %v1690 = vsel %vm1565, %v1615, %v1374
        %v1691 = vsel %vm1565, %v1617, %v1377
        %v1692 = vsel %vm1565, %v1619, %v1382
        %v1693 = vsel %vm1565, %v1621, %v1385
        %v1694 = vsel %vm1565, %v1623, %v1390
        %v1695 = vsel %vm1565, %v1625, %v1393
        %v1696 = vsel %vm1565, %v1627, %v1398
        %v1697 = vsel %vm1565, %v1629, %v1401
        %v1698 = vsel %vm1565, %v1631, %v1406
        %v1699 = vsel %vm1565, %v1633, %v1409
        %v1700 = vsel %vm1565, %v1635, %v1414
        %v1701 = vsel %vm1565, %v1637, %v1417
        %v1702 = vsel %vm1565, %v1639, %v1422
        %v1703 = vsel %vm1565, %v1641, %v1425
        %v1704 = vsel %vm1565, %v1643, %v1430
        %v1705 = vsel %vm1565, %v1645, %v1433
        %v1706 = vsel %vm1565, %v1647, %v1438
        %v1707 = vsel %vm1565, %v1649, %v1441
        %v1708 = vsel %vm1565, %v1651, %v1446
        %v1709 = vsel %vm1565, %v1653, %v1449
        %v1710 = vsel %vm1565, %v1655, %v1454
        %v1711 = vsel %vm1565, %v1657, %v1457
        %v1712 = vsel %vm1565, %v1659, %v1462
        %v1713 = vsel %vm1565, %v1661, %v1465
        %v1714 = vsel %vm1565, %v1663, %v1470
        %v1715 = vsel %vm1565, %v1665, %v1473
        %v1716 = vsel %vm1565, %v1667, %v1478
        %v1717 = vsel %vm1565, %v1669, %v1481
        %v1718 = vsel %vm1565, %v1671, %v1486
        %v1719 = vsel %vm1565, %v1673, %v1489
        %v1720 = vsel %vm1565, %v1675, %v1494
        %v1721 = vsel %vm1565, %v1677, %v1497
        %v1722 = vsel %vm1565, %v1679, %v1502
        %v1723 = vsel %vm1565, %v1681, %v1505
        %v1724 = vsel %vm1565, %v1683, %v1510
        %v1725 = vsel %vm1565, %v1685, %v1513
        %1727 = vset.pattern.permute.xlu0 3
        %1728 = vperm.xlu0 %1727, %v1516
        %v1729 = vpop.permute.xlu0 %1728
        %1732 = vset.pattern.permute.xlu0 3
        %1733 = vperm.xlu0 %1732, %v1517
        %v1734 = vpop.permute.xlu0 %1733
        %1737 = vset.pattern.permute.xlu0 3
        %1738 = vperm.xlu0 %1737, %v1518
        %v1739 = vpop.permute.xlu0 %1738
        %1742 = vset.pattern.permute.xlu0 3
        %1743 = vperm.xlu0 %1742, %v1519
        %v1744 = vpop.permute.xlu0 %1743
        %1747 = vset.pattern.permute.xlu0 3
        %1748 = vperm.xlu0 %1747, %v1520
        %v1749 = vpop.permute.xlu0 %1748
        %1752 = vset.pattern.permute.xlu0 3
        %1753 = vperm.xlu0 %1752, %v1521
        %v1754 = vpop.permute.xlu0 %1753
        %1757 = vset.pattern.permute.xlu0 3
        %1758 = vperm.xlu0 %1757, %v1522
        %v1759 = vpop.permute.xlu0 %1758
        %1762 = vset.pattern.permute.xlu0 3
        %1763 = vperm.xlu0 %1762, %v1523
        %v1764 = vpop.permute.xlu0 %1763
        %1767 = vset.pattern.permute.xlu0 3
        %1768 = vperm.xlu0 %1767, %v1524
        %v1769 = vpop.permute.xlu0 %1768
        %1772 = vset.pattern.permute.xlu0 3
        %1773 = vperm.xlu0 %1772, %v1525
        %v1774 = vpop.permute.xlu0 %1773
        %1777 = vset.pattern.permute.xlu0 3
        %1778 = vperm.xlu0 %1777, %v1526
        %v1779 = vpop.permute.xlu0 %1778
        %1782 = vset.pattern.permute.xlu0 3
        %1783 = vperm.xlu0 %1782, %v1527
        %v1784 = vpop.permute.xlu0 %1783
        %1787 = vset.pattern.permute.xlu0 3
        %1788 = vperm.xlu0 %1787, %v1528
        %v1789 = vpop.permute.xlu0 %1788
        %1792 = vset.pattern.permute.xlu0 3
        %1793 = vperm.xlu0 %1792, %v1529
        %v1794 = vpop.permute.xlu0 %1793
        %1797 = vset.pattern.permute.xlu0 3
        %1798 = vperm.xlu0 %1797, %v1530
        %v1799 = vpop.permute.xlu0 %1798
        %1802 = vset.pattern.permute.xlu0 3
        %1803 = vperm.xlu0 %1802, %v1531
        %v1804 = vpop.permute.xlu0 %1803
        %1807 = vset.pattern.permute.xlu0 3
        %1808 = vperm.xlu0 %1807, %v1532
        %v1809 = vpop.permute.xlu0 %1808
        %1812 = vset.pattern.permute.xlu0 3
        %1813 = vperm.xlu0 %1812, %v1533
        %v1814 = vpop.permute.xlu0 %1813
        %1817 = vset.pattern.permute.xlu0 3
        %1818 = vperm.xlu0 %1817, %v1534
        %v1819 = vpop.permute.xlu0 %1818
        %1822 = vset.pattern.permute.xlu0 3
        %1823 = vperm.xlu0 %1822, %v1535
        %v1824 = vpop.permute.xlu0 %1823
        %1827 = vset.pattern.permute.xlu0 3
        %1828 = vperm.xlu0 %1827, %v1536
        %v1829 = vpop.permute.xlu0 %1828
        %1832 = vset.pattern.permute.xlu0 3
        %1833 = vperm.xlu0 %1832, %v1537
        %v1834 = vpop.permute.xlu0 %1833
        %1837 = vset.pattern.permute.xlu0 3
        %1838 = vperm.xlu0 %1837, %v1538
        %v1839 = vpop.permute.xlu0 %1838
        %1842 = vset.pattern.permute.xlu0 3
        %1843 = vperm.xlu0 %1842, %v1539
        %v1844 = vpop.permute.xlu0 %1843
        %1847 = vset.pattern.permute.xlu0 3
        %1848 = vperm.xlu0 %1847, %v1540
        %v1849 = vpop.permute.xlu0 %1848
        %1852 = vset.pattern.permute.xlu0 3
        %1853 = vperm.xlu0 %1852, %v1541
        %v1854 = vpop.permute.xlu0 %1853
        %1857 = vset.pattern.permute.xlu0 3
        %1858 = vperm.xlu0 %1857, %v1542
        %v1859 = vpop.permute.xlu0 %1858
        %1862 = vset.pattern.permute.xlu0 3
        %1863 = vperm.xlu0 %1862, %v1543
        %v1864 = vpop.permute.xlu0 %1863
        %1867 = vset.pattern.permute.xlu0 3
        %1868 = vperm.xlu0 %1867, %v1544
        %v1869 = vpop.permute.xlu0 %1868
        %1872 = vset.pattern.permute.xlu0 3
        %1873 = vperm.xlu0 %1872, %v1545
        %v1874 = vpop.permute.xlu0 %1873
        %1877 = vset.pattern.permute.xlu0 3
        %1878 = vperm.xlu0 %1877, %v1546
        %v1879 = vpop.permute.xlu0 %1878
        %1882 = vset.pattern.permute.xlu0 3
        %1883 = vperm.xlu0 %1882, %v1547
        %v1884 = vpop.permute.xlu0 %1883
        %1887 = vset.pattern.permute.xlu0 3
        %1888 = vperm.xlu0 %1887, %v1548
        %v1889 = vpop.permute.xlu0 %1888
        %1892 = vset.pattern.permute.xlu0 3
        %1893 = vperm.xlu0 %1892, %v1549
        %v1894 = vpop.permute.xlu0 %1893
        %1897 = vset.pattern.permute.xlu0 3
        %1898 = vperm.xlu0 %1897, %v1550
        %v1899 = vpop.permute.xlu0 %1898
        %1902 = vset.pattern.permute.xlu0 3
        %1903 = vperm.xlu0 %1902, %v1551
        %v1904 = vpop.permute.xlu0 %1903
        %1907 = vset.pattern.permute.xlu0 3
        %1908 = vperm.xlu0 %1907, %v1552
        %v1909 = vpop.permute.xlu0 %1908
        %1912 = vset.pattern.permute.xlu0 3
        %1913 = vperm.xlu0 %1912, %v1553
        %v1914 = vpop.permute.xlu0 %1913
        %1917 = vset.pattern.permute.xlu0 3
        %1918 = vperm.xlu0 %1917, %v1554
        %v1919 = vpop.permute.xlu0 %1918
        %1922 = vset.pattern.permute.xlu0 3
        %1923 = vperm.xlu0 %1922, %v1555
        %v1924 = vpop.permute.xlu0 %1923
        %v1926 = vsel %vm1564, %v1729, 0.0
        %v1927 = vsel %vm1564, %v1734, 0.0
        %v1928 = vsel %vm1564, %v1739, 0.0
        %v1929 = vsel %vm1564, %v1744, 0.0
        %v1930 = vsel %vm1564, %v1749, 0.0
        %v1931 = vsel %vm1564, %v1754, 0.0
        %v1932 = vsel %vm1564, %v1759, 0.0
        %v1933 = vsel %vm1564, %v1764, 0.0
        %v1934 = vsel %vm1564, %v1769, 0.0
        %v1935 = vsel %vm1564, %v1774, 0.0
        %v1936 = vsel %vm1564, %v1779, 0.0
        %v1937 = vsel %vm1564, %v1784, 0.0
        %v1938 = vsel %vm1564, %v1789, 0.0
        %v1939 = vsel %vm1564, %v1794, 0.0
        %v1940 = vsel %vm1564, %v1799, 0.0
        %v1941 = vsel %vm1564, %v1804, 0.0
        %v1942 = vsel %vm1564, %v1809, 0.0
        %v1943 = vsel %vm1564, %v1814, 0.0
        %v1944 = vsel %vm1564, %v1819, 0.0
        %v1945 = vsel %vm1564, %v1824, 0.0
        %v1946 = vsel %vm1564, %v1829, 0.0
        %v1947 = vsel %vm1564, %v1834, 0.0
        %v1948 = vsel %vm1564, %v1839, 0.0
        %v1949 = vsel %vm1564, %v1844, 0.0
        %v1950 = vsel %vm1564, %v1849, 0.0
        %v1951 = vsel %vm1564, %v1854, 0.0
        %v1952 = vsel %vm1564, %v1859, 0.0
        %v1953 = vsel %vm1564, %v1864, 0.0
        %v1954 = vsel %vm1564, %v1869, 0.0
        %v1955 = vsel %vm1564, %v1874, 0.0
        %v1956 = vsel %vm1564, %v1879, 0.0
        %v1957 = vsel %vm1564, %v1884, 0.0
        %v1958 = vsel %vm1564, %v1889, 0.0
        %v1959 = vsel %vm1564, %v1894, 0.0
        %v1960 = vsel %vm1564, %v1899, 0.0
        %v1961 = vsel %vm1564, %v1904, 0.0
        %v1962 = vsel %vm1564, %v1909, 0.0
        %v1963 = vsel %vm1564, %v1914, 0.0
        %v1964 = vsel %vm1564, %v1919, 0.0
        %v1965 = vsel %vm1564, %v1924, 0.0
        %1966 = vset.pattern.permute.xlu0 2
        %1967 = vperm.xlu0 %1966, %v1516
        %v1968 = vpop.permute.xlu0 %1967
        %1970 = vset.pattern.permute.xlu0 2
        %1971 = vperm.xlu0 %1970, %v1517
        %v1972 = vpop.permute.xlu0 %1971
        %1974 = vset.pattern.permute.xlu0 2
        %1975 = vperm.xlu0 %1974, %v1518
        %v1976 = vpop.permute.xlu0 %1975
        %1978 = vset.pattern.permute.xlu0 2
        %1979 = vperm.xlu0 %1978, %v1519
        %v1980 = vpop.permute.xlu0 %1979
        %1982 = vset.pattern.permute.xlu0 2
        %1983 = vperm.xlu0 %1982, %v1520
        %v1984 = vpop.permute.xlu0 %1983
        %1986 = vset.pattern.permute.xlu0 2
        %1987 = vperm.xlu0 %1986, %v1521
        %v1988 = vpop.permute.xlu0 %1987
        %1990 = vset.pattern.permute.xlu0 2
        %1991 = vperm.xlu0 %1990, %v1522
        %v1992 = vpop.permute.xlu0 %1991
        %1994 = vset.pattern.permute.xlu0 2
        %1995 = vperm.xlu0 %1994, %v1523
        %v1996 = vpop.permute.xlu0 %1995
        %1998 = vset.pattern.permute.xlu0 2
        %1999 = vperm.xlu0 %1998, %v1524
        %v2000 = vpop.permute.xlu0 %1999
        %2002 = vset.pattern.permute.xlu0 2
        %2003 = vperm.xlu0 %2002, %v1525
        %v2004 = vpop.permute.xlu0 %2003
        %2006 = vset.pattern.permute.xlu0 2
        %2007 = vperm.xlu0 %2006, %v1526
        %v2008 = vpop.permute.xlu0 %2007
        %2010 = vset.pattern.permute.xlu0 2
        %2011 = vperm.xlu0 %2010, %v1527
        %v2012 = vpop.permute.xlu0 %2011
        %2014 = vset.pattern.permute.xlu0 2
        %2015 = vperm.xlu0 %2014, %v1528
        %v2016 = vpop.permute.xlu0 %2015
        %2018 = vset.pattern.permute.xlu0 2
        %2019 = vperm.xlu0 %2018, %v1529
        %v2020 = vpop.permute.xlu0 %2019
        %2022 = vset.pattern.permute.xlu0 2
        %2023 = vperm.xlu0 %2022, %v1530
        %v2024 = vpop.permute.xlu0 %2023
        %2026 = vset.pattern.permute.xlu0 2
        %2027 = vperm.xlu0 %2026, %v1531
        %v2028 = vpop.permute.xlu0 %2027
        %2030 = vset.pattern.permute.xlu0 2
        %2031 = vperm.xlu0 %2030, %v1532
        %v2032 = vpop.permute.xlu0 %2031
        %2034 = vset.pattern.permute.xlu0 2
        %2035 = vperm.xlu0 %2034, %v1533
        %v2036 = vpop.permute.xlu0 %2035
        %2038 = vset.pattern.permute.xlu0 2
        %2039 = vperm.xlu0 %2038, %v1534
        %v2040 = vpop.permute.xlu0 %2039
        %2042 = vset.pattern.permute.xlu0 2
        %2043 = vperm.xlu0 %2042, %v1535
        %v2044 = vpop.permute.xlu0 %2043
        %2046 = vset.pattern.permute.xlu0 2
        %2047 = vperm.xlu0 %2046, %v1536
        %v2048 = vpop.permute.xlu0 %2047
        %2050 = vset.pattern.permute.xlu0 2
        %2051 = vperm.xlu0 %2050, %v1537
        %v2052 = vpop.permute.xlu0 %2051
        %2054 = vset.pattern.permute.xlu0 2
        %2055 = vperm.xlu0 %2054, %v1538
        %v2056 = vpop.permute.xlu0 %2055
        %2058 = vset.pattern.permute.xlu0 2
        %2059 = vperm.xlu0 %2058, %v1539
        %v2060 = vpop.permute.xlu0 %2059
        %2062 = vset.pattern.permute.xlu0 2
        %2063 = vperm.xlu0 %2062, %v1540
        %v2064 = vpop.permute.xlu0 %2063
        %2066 = vset.pattern.permute.xlu0 2
        %2067 = vperm.xlu0 %2066, %v1541
        %v2068 = vpop.permute.xlu0 %2067
        %2070 = vset.pattern.permute.xlu0 2
        %2071 = vperm.xlu0 %2070, %v1542
        %v2072 = vpop.permute.xlu0 %2071
        %2074 = vset.pattern.permute.xlu0 2
        %2075 = vperm.xlu0 %2074, %v1543
        %v2076 = vpop.permute.xlu0 %2075
        %2078 = vset.pattern.permute.xlu0 2
        %2079 = vperm.xlu0 %2078, %v1544
        %v2080 = vpop.permute.xlu0 %2079
        %2082 = vset.pattern.permute.xlu0 2
        %2083 = vperm.xlu0 %2082, %v1545
        %v2084 = vpop.permute.xlu0 %2083
        %2086 = vset.pattern.permute.xlu0 2
        %2087 = vperm.xlu0 %2086, %v1546
        %v2088 = vpop.permute.xlu0 %2087
        %2090 = vset.pattern.permute.xlu0 2
        %2091 = vperm.xlu0 %2090, %v1547
        %v2092 = vpop.permute.xlu0 %2091
        %2094 = vset.pattern.permute.xlu0 2
        %2095 = vperm.xlu0 %2094, %v1548
        %v2096 = vpop.permute.xlu0 %2095
        %2098 = vset.pattern.permute.xlu0 2
        %2099 = vperm.xlu0 %2098, %v1549
        %v2100 = vpop.permute.xlu0 %2099
        %2102 = vset.pattern.permute.xlu0 2
        %2103 = vperm.xlu0 %2102, %v1550
        %v2104 = vpop.permute.xlu0 %2103
        %2106 = vset.pattern.permute.xlu0 2
        %2107 = vperm.xlu0 %2106, %v1551
        %v2108 = vpop.permute.xlu0 %2107
        %2110 = vset.pattern.permute.xlu0 2
        %2111 = vperm.xlu0 %2110, %v1552
        %v2112 = vpop.permute.xlu0 %2111
        %2114 = vset.pattern.permute.xlu0 2
        %2115 = vperm.xlu0 %2114, %v1553
        %v2116 = vpop.permute.xlu0 %2115
        %2118 = vset.pattern.permute.xlu0 2
        %2119 = vperm.xlu0 %2118, %v1554
        %v2120 = vpop.permute.xlu0 %2119
        %2122 = vset.pattern.permute.xlu0 2
        %2123 = vperm.xlu0 %2122, %v1555
        %v2124 = vpop.permute.xlu0 %2123
        %v2126 = vsel %vm1561, %v1968, %v1926
        %v2127 = vsel %vm1561, %v1972, %v1927
        %v2128 = vsel %vm1561, %v1976, %v1928
        %v2129 = vsel %vm1561, %v1980, %v1929
        %v2130 = vsel %vm1561, %v1984, %v1930
        %v2131 = vsel %vm1561, %v1988, %v1931
        %v2132 = vsel %vm1561, %v1992, %v1932
        %v2133 = vsel %vm1561, %v1996, %v1933
        %v2134 = vsel %vm1561, %v2000, %v1934
        %v2135 = vsel %vm1561, %v2004, %v1935
        %v2136 = vsel %vm1561, %v2008, %v1936
        %v2137 = vsel %vm1561, %v2012, %v1937
        %v2138 = vsel %vm1561, %v2016, %v1938
        %v2139 = vsel %vm1561, %v2020, %v1939
        %v2140 = vsel %vm1561, %v2024, %v1940
        %v2141 = vsel %vm1561, %v2028, %v1941
        %v2142 = vsel %vm1561, %v2032, %v1942
        %v2143 = vsel %vm1561, %v2036, %v1943
        %v2144 = vsel %vm1561, %v2040, %v1944
        %v2145 = vsel %vm1561, %v2044, %v1945
        %v2146 = vsel %vm1561, %v2048, %v1946
        %v2147 = vsel %vm1561, %v2052, %v1947
        %v2148 = vsel %vm1561, %v2056, %v1948
        %v2149 = vsel %vm1561, %v2060, %v1949
        %v2150 = vsel %vm1561, %v2064, %v1950
        %v2151 = vsel %vm1561, %v2068, %v1951
        %v2152 = vsel %vm1561, %v2072, %v1952
        %v2153 = vsel %vm1561, %v2076, %v1953
        %v2154 = vsel %vm1561, %v2080, %v1954
        %v2155 = vsel %vm1561, %v2084, %v1955
        %v2156 = vsel %vm1561, %v2088, %v1956
        %v2157 = vsel %vm1561, %v2092, %v1957
        %v2158 = vsel %vm1561, %v2096, %v1958
        %v2159 = vsel %vm1561, %v2100, %v1959
        %v2160 = vsel %vm1561, %v2104, %v1960
        %v2161 = vsel %vm1561, %v2108, %v1961
        %v2162 = vsel %vm1561, %v2112, %v1962
        %v2163 = vsel %vm1561, %v2116, %v1963
        %v2164 = vsel %vm1561, %v2120, %v1964
        %v2165 = vsel %vm1561, %v2124, %v1965
        %2166 = vset.pattern.permute.xlu0 1
        %2167 = vperm.xlu0 %2166, %v1516
        %v2168 = vpop.permute.xlu0 %2167
        %2170 = vset.pattern.permute.xlu0 1
        %2171 = vperm.xlu0 %2170, %v1517
        %v2172 = vpop.permute.xlu0 %2171
        %2174 = vset.pattern.permute.xlu0 1
        %2175 = vperm.xlu0 %2174, %v1518
        %v2176 = vpop.permute.xlu0 %2175
        %2178 = vset.pattern.permute.xlu0 1
        %2179 = vperm.xlu0 %2178, %v1519
        %v2180 = vpop.permute.xlu0 %2179
        %2182 = vset.pattern.permute.xlu0 1
        %2183 = vperm.xlu0 %2182, %v1520
        %v2184 = vpop.permute.xlu0 %2183
        %2186 = vset.pattern.permute.xlu0 1
        %2187 = vperm.xlu0 %2186, %v1521
        %v2188 = vpop.permute.xlu0 %2187
        %2190 = vset.pattern.permute.xlu0 1
        %2191 = vperm.xlu0 %2190, %v1522
        %v2192 = vpop.permute.xlu0 %2191
        %2194 = vset.pattern.permute.xlu0 1
        %2195 = vperm.xlu0 %2194, %v1523
        %v2196 = vpop.permute.xlu0 %2195
        %2198 = vset.pattern.permute.xlu0 1
        %2199 = vperm.xlu0 %2198, %v1524
        %v2200 = vpop.permute.xlu0 %2199
        %2202 = vset.pattern.permute.xlu0 1
        %2203 = vperm.xlu0 %2202, %v1525
        %v2204 = vpop.permute.xlu0 %2203
        %2206 = vset.pattern.permute.xlu0 1
        %2207 = vperm.xlu0 %2206, %v1526
        %v2208 = vpop.permute.xlu0 %2207
        %2210 = vset.pattern.permute.xlu0 1
        %2211 = vperm.xlu0 %2210, %v1527
        %v2212 = vpop.permute.xlu0 %2211
        %2214 = vset.pattern.permute.xlu0 1
        %2215 = vperm.xlu0 %2214, %v1528
        %v2216 = vpop.permute.xlu0 %2215
        %2218 = vset.pattern.permute.xlu0 1
        %2219 = vperm.xlu0 %2218, %v1529
        %v2220 = vpop.permute.xlu0 %2219
        %2222 = vset.pattern.permute.xlu0 1
        %2223 = vperm.xlu0 %2222, %v1530
        %v2224 = vpop.permute.xlu0 %2223
        %2226 = vset.pattern.permute.xlu0 1
        %2227 = vperm.xlu0 %2226, %v1531
        %v2228 = vpop.permute.xlu0 %2227
        %2230 = vset.pattern.permute.xlu0 1
        %2231 = vperm.xlu0 %2230, %v1532
        %v2232 = vpop.permute.xlu0 %2231
        %2234 = vset.pattern.permute.xlu0 1
        %2235 = vperm.xlu0 %2234, %v1533
        %v2236 = vpop.permute.xlu0 %2235
        %2238 = vset.pattern.permute.xlu0 1
        %2239 = vperm.xlu0 %2238, %v1534
        %v2240 = vpop.permute.xlu0 %2239
        %2242 = vset.pattern.permute.xlu0 1
        %2243 = vperm.xlu0 %2242, %v1535
        %v2244 = vpop.permute.xlu0 %2243
        %2246 = vset.pattern.permute.xlu0 1
        %2247 = vperm.xlu0 %2246, %v1536
        %v2248 = vpop.permute.xlu0 %2247
        %2250 = vset.pattern.permute.xlu0 1
        %2251 = vperm.xlu0 %2250, %v1537
        %v2252 = vpop.permute.xlu0 %2251
        %2254 = vset.pattern.permute.xlu0 1
        %2255 = vperm.xlu0 %2254, %v1538
        %v2256 = vpop.permute.xlu0 %2255
        %2258 = vset.pattern.permute.xlu0 1
        %2259 = vperm.xlu0 %2258, %v1539
        %v2260 = vpop.permute.xlu0 %2259
        %2262 = vset.pattern.permute.xlu0 1
        %2263 = vperm.xlu0 %2262, %v1540
        %v2264 = vpop.permute.xlu0 %2263
        %2266 = vset.pattern.permute.xlu0 1
        %2267 = vperm.xlu0 %2266, %v1541
        %v2268 = vpop.permute.xlu0 %2267
        %2270 = vset.pattern.permute.xlu0 1
        %2271 = vperm.xlu0 %2270, %v1542
        %v2272 = vpop.permute.xlu0 %2271
        %2274 = vset.pattern.permute.xlu0 1
        %2275 = vperm.xlu0 %2274, %v1543
        %v2276 = vpop.permute.xlu0 %2275
        %2278 = vset.pattern.permute.xlu0 1
        %2279 = vperm.xlu0 %2278, %v1544
        %v2280 = vpop.permute.xlu0 %2279
        %2282 = vset.pattern.permute.xlu0 1
        %2283 = vperm.xlu0 %2282, %v1545
        %v2284 = vpop.permute.xlu0 %2283
        %2286 = vset.pattern.permute.xlu0 1
        %2287 = vperm.xlu0 %2286, %v1546
        %v2288 = vpop.permute.xlu0 %2287
        %2290 = vset.pattern.permute.xlu0 1
        %2291 = vperm.xlu0 %2290, %v1547
        %v2292 = vpop.permute.xlu0 %2291
        %2294 = vset.pattern.permute.xlu0 1
        %2295 = vperm.xlu0 %2294, %v1548
        %v2296 = vpop.permute.xlu0 %2295
        %2298 = vset.pattern.permute.xlu0 1
        %2299 = vperm.xlu0 %2298, %v1549
        %v2300 = vpop.permute.xlu0 %2299
        %2302 = vset.pattern.permute.xlu0 1
        %2303 = vperm.xlu0 %2302, %v1550
        %v2304 = vpop.permute.xlu0 %2303
        %2306 = vset.pattern.permute.xlu0 1
        %2307 = vperm.xlu0 %2306, %v1551
        %v2308 = vpop.permute.xlu0 %2307
        %2310 = vset.pattern.permute.xlu0 1
        %2311 = vperm.xlu0 %2310, %v1552
        %v2312 = vpop.permute.xlu0 %2311
        %2314 = vset.pattern.permute.xlu0 1
        %2315 = vperm.xlu0 %2314, %v1553
        %v2316 = vpop.permute.xlu0 %2315
        %2318 = vset.pattern.permute.xlu0 1
        %2319 = vperm.xlu0 %2318, %v1554
        %v2320 = vpop.permute.xlu0 %2319
        %2322 = vset.pattern.permute.xlu0 1
        %2323 = vperm.xlu0 %2322, %v1555
        %v2324 = vpop.permute.xlu0 %2323
        %v2326 = vsel %vm1562, %v2168, 0.0
        %v2327 = vsel %vm1562, %v2172, 0.0
        %v2328 = vsel %vm1562, %v2176, 0.0
        %v2329 = vsel %vm1562, %v2180, 0.0
        %v2330 = vsel %vm1562, %v2184, 0.0
        %v2331 = vsel %vm1562, %v2188, 0.0
        %v2332 = vsel %vm1562, %v2192, 0.0
        %v2333 = vsel %vm1562, %v2196, 0.0
        %v2334 = vsel %vm1562, %v2200, 0.0
        %v2335 = vsel %vm1562, %v2204, 0.0
        %v2336 = vsel %vm1562, %v2208, 0.0
        %v2337 = vsel %vm1562, %v2212, 0.0
        %v2338 = vsel %vm1562, %v2216, 0.0
        %v2339 = vsel %vm1562, %v2220, 0.0
        %v2340 = vsel %vm1562, %v2224, 0.0
        %v2341 = vsel %vm1562, %v2228, 0.0
        %v2342 = vsel %vm1562, %v2232, 0.0
        %v2343 = vsel %vm1562, %v2236, 0.0
        %v2344 = vsel %vm1562, %v2240, 0.0
        %v2345 = vsel %vm1562, %v2244, 0.0
        %v2346 = vsel %vm1562, %v2248, 0.0
        %v2347 = vsel %vm1562, %v2252, 0.0
        %v2348 = vsel %vm1562, %v2256, 0.0
        %v2349 = vsel %vm1562, %v2260, 0.0
        %v2350 = vsel %vm1562, %v2264, 0.0
        %v2351 = vsel %vm1562, %v2268, 0.0
        %v2352 = vsel %vm1562, %v2272, 0.0
        %v2353 = vsel %vm1562, %v2276, 0.0
        %v2354 = vsel %vm1562, %v2280, 0.0
        %v2355 = vsel %vm1562, %v2284, 0.0
        %v2356 = vsel %vm1562, %v2288, 0.0
        %v2357 = vsel %vm1562, %v2292, 0.0
        %v2358 = vsel %vm1562, %v2296, 0.0
        %v2359 = vsel %vm1562, %v2300, 0.0
        %v2360 = vsel %vm1562, %v2304, 0.0
        %v2361 = vsel %vm1562, %v2308, 0.0
        %v2362 = vsel %vm1562, %v2312, 0.0
        %v2363 = vsel %vm1562, %v2316, 0.0
        %v2364 = vsel %vm1562, %v2320, 0.0
        %v2365 = vsel %vm1562, %v2324, 0.0
        %2366 = vset.pattern.permute.xlu0 0
        %2367 = vperm.xlu0 %2366, %v1516
        %v2368 = vpop.permute.xlu0 %2367
        %2370 = vset.pattern.permute.xlu0 0
        %2371 = vperm.xlu0 %2370, %v1517
        %v2372 = vpop.permute.xlu0 %2371
        %2374 = vset.pattern.permute.xlu0 0
        %2375 = vperm.xlu0 %2374, %v1518
        %v2376 = vpop.permute.xlu0 %2375
        %2378 = vset.pattern.permute.xlu0 0
        %2379 = vperm.xlu0 %2378, %v1519
        %v2380 = vpop.permute.xlu0 %2379
        %2382 = vset.pattern.permute.xlu0 0
        %2383 = vperm.xlu0 %2382, %v1520
        %v2384 = vpop.permute.xlu0 %2383
        %2386 = vset.pattern.permute.xlu0 0
        %2387 = vperm.xlu0 %2386, %v1521
        %v2388 = vpop.permute.xlu0 %2387
        %2390 = vset.pattern.permute.xlu0 0
        %2391 = vperm.xlu0 %2390, %v1522
        %v2392 = vpop.permute.xlu0 %2391
        %2394 = vset.pattern.permute.xlu0 0
        %2395 = vperm.xlu0 %2394, %v1523
        %v2396 = vpop.permute.xlu0 %2395
        %2398 = vset.pattern.permute.xlu0 0
        %2399 = vperm.xlu0 %2398, %v1524
        %v2400 = vpop.permute.xlu0 %2399
        %2402 = vset.pattern.permute.xlu0 0
        %2403 = vperm.xlu0 %2402, %v1525
        %v2404 = vpop.permute.xlu0 %2403
        %2406 = vset.pattern.permute.xlu0 0
        %2407 = vperm.xlu0 %2406, %v1526
        %v2408 = vpop.permute.xlu0 %2407
        %2410 = vset.pattern.permute.xlu0 0
        %2411 = vperm.xlu0 %2410, %v1527
        %v2412 = vpop.permute.xlu0 %2411
        %2414 = vset.pattern.permute.xlu0 0
        %2415 = vperm.xlu0 %2414, %v1528
        %v2416 = vpop.permute.xlu0 %2415
        %2418 = vset.pattern.permute.xlu0 0
        %2419 = vperm.xlu0 %2418, %v1529
        %v2420 = vpop.permute.xlu0 %2419
        %2422 = vset.pattern.permute.xlu0 0
        %2423 = vperm.xlu0 %2422, %v1530
        %v2424 = vpop.permute.xlu0 %2423
        %2426 = vset.pattern.permute.xlu0 0
        %2427 = vperm.xlu0 %2426, %v1531
        %v2428 = vpop.permute.xlu0 %2427
        %2430 = vset.pattern.permute.xlu0 0
        %2431 = vperm.xlu0 %2430, %v1532
        %v2432 = vpop.permute.xlu0 %2431
        %2434 = vset.pattern.permute.xlu0 0
        %2435 = vperm.xlu0 %2434, %v1533
        %v2436 = vpop.permute.xlu0 %2435
        %2438 = vset.pattern.permute.xlu0 0
        %2439 = vperm.xlu0 %2438, %v1534
        %v2440 = vpop.permute.xlu0 %2439
        %2442 = vset.pattern.permute.xlu0 0
        %2443 = vperm.xlu0 %2442, %v1535
        %v2444 = vpop.permute.xlu0 %2443
        %2446 = vset.pattern.permute.xlu0 0
        %2447 = vperm.xlu0 %2446, %v1536
        %v2448 = vpop.permute.xlu0 %2447
        %2450 = vset.pattern.permute.xlu0 0
        %2451 = vperm.xlu0 %2450, %v1537
        %v2452 = vpop.permute.xlu0 %2451
        %2454 = vset.pattern.permute.xlu0 0
        %2455 = vperm.xlu0 %2454, %v1538
        %v2456 = vpop.permute.xlu0 %2455
        %2458 = vset.pattern.permute.xlu0 0
        %2459 = vperm.xlu0 %2458, %v1539
        %v2460 = vpop.permute.xlu0 %2459
        %2462 = vset.pattern.permute.xlu0 0
        %2463 = vperm.xlu0 %2462, %v1540
        %v2464 = vpop.permute.xlu0 %2463
        %2466 = vset.pattern.permute.xlu0 0
        %2467 = vperm.xlu0 %2466, %v1541
        %v2468 = vpop.permute.xlu0 %2467
        %2470 = vset.pattern.permute.xlu0 0
        %2471 = vperm.xlu0 %2470, %v1542
        %v2472 = vpop.permute.xlu0 %2471
        %2474 = vset.pattern.permute.xlu0 0
        %2475 = vperm.xlu0 %2474, %v1543
        %v2476 = vpop.permute.xlu0 %2475
        %2478 = vset.pattern.permute.xlu0 0
        %2479 = vperm.xlu0 %2478, %v1544
        %v2480 = vpop.permute.xlu0 %2479
        %2482 = vset.pattern.permute.xlu0 0
        %2483 = vperm.xlu0 %2482, %v1545
        %v2484 = vpop.permute.xlu0 %2483
        %2486 = vset.pattern.permute.xlu0 0
        %2487 = vperm.xlu0 %2486, %v1546
        %v2488 = vpop.permute.xlu0 %2487
        %2490 = vset.pattern.permute.xlu0 0
        %2491 = vperm.xlu0 %2490, %v1547
        %v2492 = vpop.permute.xlu0 %2491
        %2494 = vset.pattern.permute.xlu0 0
        %2495 = vperm.xlu0 %2494, %v1548
        %v2496 = vpop.permute.xlu0 %2495
        %2498 = vset.pattern.permute.xlu0 0
        %2499 = vperm.xlu0 %2498, %v1549
        %v2500 = vpop.permute.xlu0 %2499
        %2502 = vset.pattern.permute.xlu0 0
        %2503 = vperm.xlu0 %2502, %v1550
        %v2504 = vpop.permute.xlu0 %2503
        %2506 = vset.pattern.permute.xlu0 0
        %2507 = vperm.xlu0 %2506, %v1551
        %v2508 = vpop.permute.xlu0 %2507
        %2510 = vset.pattern.permute.xlu0 0
        %2511 = vperm.xlu0 %2510, %v1552
        %v2512 = vpop.permute.xlu0 %2511
        %2514 = vset.pattern.permute.xlu0 0
        %2515 = vperm.xlu0 %2514, %v1553
        %v2516 = vpop.permute.xlu0 %2515
        %2518 = vset.pattern.permute.xlu0 0
        %2519 = vperm.xlu0 %2518, %v1554
        %v2520 = vpop.permute.xlu0 %2519
        %2522 = vset.pattern.permute.xlu0 0
        %2523 = vperm.xlu0 %2522, %v1555
        %v2524 = vpop.permute.xlu0 %2523
        %v2526 = vsel %vm1559, %v2368, %v2326
        %v2527 = vsel %vm1559, %v2372, %v2327
        %v2528 = vsel %vm1559, %v2376, %v2328
        %v2529 = vsel %vm1559, %v2380, %v2329
        %v2530 = vsel %vm1559, %v2384, %v2330
        %v2531 = vsel %vm1559, %v2388, %v2331
        %v2532 = vsel %vm1559, %v2392, %v2332
        %v2533 = vsel %vm1559, %v2396, %v2333
        %v2534 = vsel %vm1559, %v2400, %v2334
        %v2535 = vsel %vm1559, %v2404, %v2335
        %v2536 = vsel %vm1559, %v2408, %v2336
        %v2537 = vsel %vm1559, %v2412, %v2337
        %v2538 = vsel %vm1559, %v2416, %v2338
        %v2539 = vsel %vm1559, %v2420, %v2339
        %v2540 = vsel %vm1559, %v2424, %v2340
        %v2541 = vsel %vm1559, %v2428, %v2341
        %v2542 = vsel %vm1559, %v2432, %v2342
        %v2543 = vsel %vm1559, %v2436, %v2343
        %v2544 = vsel %vm1559, %v2440, %v2344
        %v2545 = vsel %vm1559, %v2444, %v2345
        %v2546 = vsel %vm1559, %v2448, %v2346
        %v2547 = vsel %vm1559, %v2452, %v2347
        %v2548 = vsel %vm1559, %v2456, %v2348
        %v2549 = vsel %vm1559, %v2460, %v2349
        %v2550 = vsel %vm1559, %v2464, %v2350
        %v2551 = vsel %vm1559, %v2468, %v2351
        %v2552 = vsel %vm1559, %v2472, %v2352
        %v2553 = vsel %vm1559, %v2476, %v2353
        %v2554 = vsel %vm1559, %v2480, %v2354
        %v2555 = vsel %vm1559, %v2484, %v2355
        %v2556 = vsel %vm1559, %v2488, %v2356
        %v2557 = vsel %vm1559, %v2492, %v2357
        %v2558 = vsel %vm1559, %v2496, %v2358
        %v2559 = vsel %vm1559, %v2500, %v2359
        %v2560 = vsel %vm1559, %v2504, %v2360
        %v2561 = vsel %vm1559, %v2508, %v2361
        %v2562 = vsel %vm1559, %v2512, %v2362
        %v2563 = vsel %vm1559, %v2516, %v2363
        %v2564 = vsel %vm1559, %v2520, %v2364
        %v2565 = vsel %vm1559, %v2524, %v2365
        %v2566 = vmul.f32 %v1686, %v2126
        %v2567 = vmul.f32 %v1687, %v2127
        %v2568 = vmul.f32 %v1688, %v2128
        %v2569 = vmul.f32 %v1689, %v2129
        %v2570 = vmul.f32 %v1690, %v2130
        %v2571 = vmul.f32 %v1691, %v2131
        %v2572 = vmul.f32 %v1692, %v2132
        %v2573 = vmul.f32 %v1693, %v2133
        %v2574 = vmul.f32 %v1694, %v2134
        %v2575 = vmul.f32 %v1695, %v2135
        %v2576 = vmul.f32 %v1696, %v2136
        %v2577 = vmul.f32 %v1697, %v2137
        %v2578 = vmul.f32 %v1698, %v2138
        %v2579 = vmul.f32 %v1699, %v2139
        %v2580 = vmul.f32 %v1700, %v2140
        %v2581 = vmul.f32 %v1701, %v2141
        %v2582 = vmul.f32 %v1702, %v2142
        %v2583 = vmul.f32 %v1703, %v2143
        %v2584 = vmul.f32 %v1704, %v2144
        %v2585 = vmul.f32 %v1705, %v2145
        %v2586 = vmul.f32 %v1706, %v2146
        %v2587 = vmul.f32 %v1707, %v2147
        %v2588 = vmul.f32 %v1708, %v2148
        %v2589 = vmul.f32 %v1709, %v2149
        %v2590 = vmul.f32 %v1710, %v2150
        %v2591 = vmul.f32 %v1711, %v2151
        %v2592 = vmul.f32 %v1712, %v2152
        %v2593 = vmul.f32 %v1713, %v2153
        %v2594 = vmul.f32 %v1714, %v2154
        %v2595 = vmul.f32 %v1715, %v2155
        %v2596 = vmul.f32 %v1716, %v2156
        %v2597 = vmul.f32 %v1717, %v2157
        %v2598 = vmul.f32 %v1718, %v2158
        %v2599 = vmul.f32 %v1719, %v2159
        %v2600 = vmul.f32 %v1720, %v2160
        %v2601 = vmul.f32 %v1721, %v2161
        %v2602 = vmul.f32 %v1722, %v2162
        %v2603 = vmul.f32 %v1723, %v2163
        %v2604 = vmul.f32 %v1724, %v2164
        %v2605 = vmul.f32 %v1725, %v2165
        %v2606 = vadd.f32 %v2566, %v2526
        %v2607 = vadd.f32 %v2567, %v2527
        %v2608 = vadd.f32 %v2568, %v2528
        %v2609 = vadd.f32 %v2569, %v2529
        %v2610 = vadd.f32 %v2570, %v2530
        %v2611 = vadd.f32 %v2571, %v2531
        %v2612 = vadd.f32 %v2572, %v2532
        %v2613 = vadd.f32 %v2573, %v2533
        %v2614 = vadd.f32 %v2574, %v2534
        %v2615 = vadd.f32 %v2575, %v2535
        %v2616 = vadd.f32 %v2576, %v2536
        %v2617 = vadd.f32 %v2577, %v2537
        %v2618 = vadd.f32 %v2578, %v2538
        %v2619 = vadd.f32 %v2579, %v2539
        %v2620 = vadd.f32 %v2580, %v2540
        %v2621 = vadd.f32 %v2581, %v2541
        %v2622 = vadd.f32 %v2582, %v2542
        %v2623 = vadd.f32 %v2583, %v2543
        %v2624 = vadd.f32 %v2584, %v2544
        %v2625 = vadd.f32 %v2585, %v2545
        %v2626 = vadd.f32 %v2586, %v2546
        %v2627 = vadd.f32 %v2587, %v2547
        %v2628 = vadd.f32 %v2588, %v2548
        %v2629 = vadd.f32 %v2589, %v2549
        %v2630 = vadd.f32 %v2590, %v2550
        %v2631 = vadd.f32 %v2591, %v2551
        %v2632 = vadd.f32 %v2592, %v2552
        %v2633 = vadd.f32 %v2593, %v2553
        %v2634 = vadd.f32 %v2594, %v2554
        %v2635 = vadd.f32 %v2595, %v2555
        %v2636 = vadd.f32 %v2596, %v2556
        %v2637 = vadd.f32 %v2597, %v2557
        %v2638 = vadd.f32 %v2598, %v2558
        %v2639 = vadd.f32 %v2599, %v2559
        %v2640 = vadd.f32 %v2600, %v2560
        %v2641 = vadd.f32 %v2601, %v2561
        %v2642 = vadd.f32 %v2602, %v2562
        %v2643 = vadd.f32 %v2603, %v2563
        %v2644 = vadd.f32 %v2604, %v2564
        %v2645 = vadd.f32 %v2605, %v2565
        %vm2646 = vcmp.eq.s32.totalorder %v1558, 4
        %v2647 = vsel %vm2646, %v765, %v2606
        %v2648 = vsel %vm2646, %v767, %v2607
        %v2649 = vsel %vm2646, %v769, %v2608
        %v2650 = vsel %vm2646, %v771, %v2609
        %v2651 = vsel %vm2646, %v773, %v2610
        %v2652 = vsel %vm2646, %v775, %v2611
        %v2653 = vsel %vm2646, %v777, %v2612
        %v2654 = vsel %vm2646, %v779, %v2613
        %v2655 = vsel %vm2646, %v781, %v2614
        %v2656 = vsel %vm2646, %v783, %v2615
        %v2657 = vsel %vm2646, %v785, %v2616
        %v2658 = vsel %vm2646, %v787, %v2617
        %v2659 = vsel %vm2646, %v789, %v2618
        %v2660 = vsel %vm2646, %v791, %v2619
        %v2661 = vsel %vm2646, %v793, %v2620
        %v2662 = vsel %vm2646, %v795, %v2621
        %v2663 = vsel %vm2646, %v797, %v2622
        %v2664 = vsel %vm2646, %v799, %v2623
        %v2665 = vsel %vm2646, %v801, %v2624
        %v2666 = vsel %vm2646, %v803, %v2625
        %v2667 = vsel %vm2646, %v805, %v2626
        %v2668 = vsel %vm2646, %v807, %v2627
        %v2669 = vsel %vm2646, %v809, %v2628
        %v2670 = vsel %vm2646, %v811, %v2629
        %v2671 = vsel %vm2646, %v813, %v2630
        %v2672 = vsel %vm2646, %v815, %v2631
        %v2673 = vsel %vm2646, %v817, %v2632
        %v2674 = vsel %vm2646, %v819, %v2633
        %v2675 = vsel %vm2646, %v821, %v2634
        %v2676 = vsel %vm2646, %v823, %v2635
        %v2677 = vsel %vm2646, %v825, %v2636
        %v2678 = vsel %vm2646, %v827, %v2637
        %v2679 = vsel %vm2646, %v829, %v2638
        %v2680 = vsel %vm2646, %v831, %v2639
        %v2681 = vsel %vm2646, %v833, %v2640
        %v2682 = vsel %vm2646, %v835, %v2641
        %v2683 = vsel %vm2646, %v837, %v2642
        %v2684 = vsel %vm2646, %v839, %v2643
        %v2685 = vsel %vm2646, %v841, %v2644
        %v2686 = vsel %vm2646, %v843, %v2645
        %vm2687 = vcmp.ge.s32.totalorder %v1558, 0
        %vm2688 = vcmp.le.s32.totalorder %v1558, 4
        %vm2689 = vmand %vm2687, %vm2688
        %v2690 = vsel %vm2689, %v2647, %v566
        %v2691 = vsel %vm2689, %v2648, %v570
        %v2692 = vsel %vm2689, %v2649, %v576
        %v2693 = vsel %vm2689, %v2650, %v580
        %v2694 = vsel %vm2689, %v2651, %v586
        %v2695 = vsel %vm2689, %v2652, %v590
        %v2696 = vsel %vm2689, %v2653, %v596
        %v2697 = vsel %vm2689, %v2654, %v600
        %v2698 = vsel %vm2689, %v2655, %v606
        %v2699 = vsel %vm2689, %v2656, %v610
        %v2700 = vsel %vm2689, %v2657, %v616
        %v2701 = vsel %vm2689, %v2658, %v620
        %v2702 = vsel %vm2689, %v2659, %v626
        %v2703 = vsel %vm2689, %v2660, %v630
        %v2704 = vsel %vm2689, %v2661, %v636
        %v2705 = vsel %vm2689, %v2662, %v640
        %v2706 = vsel %vm2689, %v2663, %v646
        %v2707 = vsel %vm2689, %v2664, %v650
        %v2708 = vsel %vm2689, %v2665, %v656
        %v2709 = vsel %vm2689, %v2666, %v660
        %v2710 = vsel %vm2689, %v2667, %v666
        %v2711 = vsel %vm2689, %v2668, %v670
        %v2712 = vsel %vm2689, %v2669, %v676
        %v2713 = vsel %vm2689, %v2670, %v680
        %v2714 = vsel %vm2689, %v2671, %v686
        %v2715 = vsel %vm2689, %v2672, %v690
        %v2716 = vsel %vm2689, %v2673, %v696
        %v2717 = vsel %vm2689, %v2674, %v700
        %v2718 = vsel %vm2689, %v2675, %v706
        %v2719 = vsel %vm2689, %v2676, %v710
        %v2720 = vsel %vm2689, %v2677, %v716
        %v2721 = vsel %vm2689, %v2678, %v720
        %v2722 = vsel %vm2689, %v2679, %v726
        %v2723 = vsel %vm2689, %v2680, %v730
        %v2724 = vsel %vm2689, %v2681, %v736
        %v2725 = vsel %vm2689, %v2682, %v740
        %v2726 = vsel %vm2689, %v2683, %v746
        %v2727 = vsel %vm2689, %v2684, %v750
        %v2728 = vsel %vm2689, %v2685, %v756
        %v2729 = vsel %vm2689, %v2686, %v760
        %2730 = vst [vmem:[%s339] sm:$0xff] %v2690
        %2731 = vst [vmem:[%s339 + $0x8] sm:$0xff] %v2691
        %2732 = vst [vmem:[%s339 + $0x10] sm:$0xff] %v2692
        %2733 = vst [vmem:[%s339 + $0x18] sm:$0xff] %v2693
        %2734 = vst [vmem:[%s339 + $0x20] sm:$0xff] %v2694
        %2735 = vst [vmem:[%s339 + $0x28] sm:$0xff] %v2695
        %2736 = vst [vmem:[%s339 + $0x30] sm:$0xff] %v2696
        %2737 = vst [vmem:[%s339 + $0x38] sm:$0xff] %v2697
        %2738 = vst [vmem:[%s339 + $0x40] sm:$0xff] %v2698
        %2739 = vst [vmem:[%s339 + $0x48] sm:$0xff] %v2699
        %2740 = vst [vmem:[%s339 + $0x50] sm:$0xff] %v2700
        %2741 = vst [vmem:[%s339 + $0x58] sm:$0xff] %v2701
        %2742 = vst [vmem:[%s339 + $0x60] sm:$0xff] %v2702
        %2743 = vst [vmem:[%s339 + $0x68] sm:$0xff] %v2703
        %2744 = vst [vmem:[%s339 + $0x70] sm:$0xff] %v2704
        %2745 = vst [vmem:[%s339 + $0x78] sm:$0xff] %v2705
        %2746 = vst [vmem:[%s339 + $0x80] sm:$0xff] %v2706
        %2747 = vst [vmem:[%s339 + $0x88] sm:$0xff] %v2707
        %2748 = vst [vmem:[%s339 + $0x90] sm:$0xff] %v2708
        %2749 = vst [vmem:[%s339 + $0x98] sm:$0xff] %v2709
        %2750 = vst [vmem:[%s339 + $0xa0] sm:$0xff] %v2710
        %2751 = vst [vmem:[%s339 + $0xa8] sm:$0xff] %v2711
        %2752 = vst [vmem:[%s339 + $0xb0] sm:$0xff] %v2712
        %2753 = vst [vmem:[%s339 + $0xb8] sm:$0xff] %v2713
        %2754 = vst [vmem:[%s339 + $0xc0] sm:$0xff] %v2714
        %2755 = vst [vmem:[%s339 + $0xc8] sm:$0xff] %v2715
        %2756 = vst [vmem:[%s339 + $0xd0] sm:$0xff] %v2716
        %2757 = vst [vmem:[%s339 + $0xd8] sm:$0xff] %v2717
        %2758 = vst [vmem:[%s339 + $0xe0] sm:$0xff] %v2718
        %2759 = vst [vmem:[%s339 + $0xe8] sm:$0xff] %v2719
        %2760 = vst [vmem:[%s339 + $0xf0] sm:$0xff] %v2720
        %2761 = vst [vmem:[%s339 + $0xf8] sm:$0xff] %v2721
        %2762 = vst [vmem:[%s339 + $0x100] sm:$0xff] %v2722
        %2763 = vst [vmem:[%s339 + $0x108] sm:$0xff] %v2723
        %2764 = vst [vmem:[%s339 + $0x110] sm:$0xff] %v2724
        %2765 = vst [vmem:[%s339 + $0x118] sm:$0xff] %v2725
        %2766 = vst [vmem:[%s339 + $0x120] sm:$0xff] %v2726
        %2767 = vst [vmem:[%s339 + $0x128] sm:$0xff] %v2727
        %2768 = vst [vmem:[%s339 + $0x130] sm:$0xff] %v2728
        %2769 = vst [vmem:[%s339 + $0x138] sm:$0xff] %v2729
        %s2770 = sand.u32 %s208, 1
        %s2771 = scalar_lea.sflag [#allocation3], %s2770
        %s2772 = sand.u32 %s208, 1
        %s2773 = smul.addr %s2772, 320
        %s2774 = scalar_lea.vmem [#allocation2], %s2773
        // Predicated region
        $region53: #{tpu_custom_call.1} parent=51 // pred_check
          %p2775 = pneg %p218
        $region54: #{tpu_custom_call.1} parent=51 // pred_check_branch
          %2777 = sbr.rel (%p2775) target = $region56
        $region55: #{tpu_custom_call.1} parent=51 // pred_region
          %s2778 = smul.u32 40, %s22
          %s2779 = ssub.s32 75, %s2778
          %p2780 = scmp.lt.s32.totalorder %s2779, 40
          %s2781 = scalar_select %p2780, %s2779, 40
          %s2782 = smul.u32 128, %s2781
          %s2784 = ssub.s32 5120, %s2782
          %2785 = vsyncadd %s2771, %s2784
          %p2786 = scmp.ne.s32.totalorder 0, %s2782
          %s2787 = smul.addr %s2778, 128
          %s2788 = scalar_lea.hbm %s8, %s2787
          %s2789 = smul.u32 8, %s2781
          %s2790 = sshll.u32 %s2774, 4
          %s2791 = int_to_ptr.vmem [resolvable:$true] %s2790
          %s2792 = sshll.u32 %s2789, 4
          %2796 = dma.vmem_to_hbm [thread:$0]  (%p2786), %s2791, %s2792, %s2788, %s2771, 128, 128, 8
        $region56: #{tpu_custom_call.1} parent=51 // pred_fallthru
          _
      $region52: #{tpu_custom_call.1} parent=5 // pred_fallthru
        _
      %p2797 = scmp.le.s32.totalorder 2, %s17
      // Predicated region
      $region57: #{tpu_custom_call.1} parent=5 // pred_check
        %p2798 = pneg %p2797
      $region58: #{tpu_custom_call.1} parent=5 // pred_check_branch
        %2800 = sbr.rel (%p2798) target = $region60
      $region59: #{tpu_custom_call.1} parent=5 // pred_region
        %s2801 = ssub.s32 %s17, 2
        // Predicated region
        $region61: #{tpu_custom_call.1} parent=59 // pred_check
          %p2802 = pneg %p224
        $region62: #{tpu_custom_call.1} parent=59 // pred_check_branch
          %2804 = sbr.rel (%p2802) target = $region64
        $region63: #{tpu_custom_call.1} parent=59 // pred_region
          %s2805 = sand.u32 %s209, 1
          %s2806 = scalar_lea.sflag [#allocation3], %s2805
          %s2807 = sand.u32 %s209, 1
          %s2808 = smul.addr %s2807, 320
          %s2809 = scalar_lea.vmem [#allocation2], %s2808
          %2810 = dma.done %s2806, 5120
        $region64: #{tpu_custom_call.1} parent=59 // pred_fallthru
          _
      $region60: #{tpu_custom_call.1} parent=5 // pred_fallthru
        _
    $region6: #{tpu_custom_call.1} parent=1 // loop_footer
      %s21 = sadd.s32 1, %s17
    $region7: #{tpu_custom_call.1} parent=1 // loop_footer_branch
      %16 = sbr.rel target = $region3
    $region8: #{tpu_custom_call.1} parent=1 // loop_exit
      _
    %2811 = vsyncpa [#allocation3], 1
    %s2812 = scalar_lea.sflag [#allocation3], 1
    %2813 = vsyncpa %s2812, 1

</llo_original>
